<compile_context>
chip_gen: v6e
topology: v6e:2x2x1
jax: 0.10.0
libtpu: 0.0.40
codegen_flags: <defaults>
</compile_context>

<pallas_src>
import functools
import inspect
import math

import jax
import jax.numpy as jnp
from jax.experimental import pallas as pl
from jax.experimental.pallas import tpu as pltpu


# ----------------------------------------------------------------------------
# Kernel
# ----------------------------------------------------------------------------
def _attention_kernel(n_heads, head_dim, tq, eps, approx_recip,
                      x_ref, bias_ref,
                      wq_ref, bq_ref, wk_ref, bk_ref, wv_ref, bv_ref,
                      wo_ref, bo_ref, gamma_ref, beta_ref,
                      o_ref,
                      k_s, v_s):
    # x_ref block:      (1, T, C)        f32  (full sequence of one batch row)
    # bias_ref block:   (1, 1, T)        f32  additive key-mask bias
    # wq/wk/wv_ref:     (n_heads, C, D)  bf16 (1/sqrt(D) folded into wq)
    # bq/bk/bv_ref:     (n_heads, 1, D)  f32  (1/sqrt(D) folded into bq)
    # wo_ref:           (C, C)           bf16; bo/gamma/beta: (1, C) f32
    # o_ref block:      (1, tq, C)       f32
    # k_s/v_s scratch:  (n_heads, T, D)  bf16, head-major, persist across qi
    T = x_ref.shape[1]
    qi = pl.program_id(1)

    # ---- per-batch-row prologue: K / V projections for the whole sequence,
    #      one head at a time (f32 temporaries bounded at (T, D)).
    @pl.when(qi == 0)
    def _():
        xb = x_ref[0].astype(jnp.bfloat16)                        # (T, C)
        for h in range(n_heads):
            kh = jnp.dot(xb, wk_ref[h],
                         preferred_element_type=jnp.float32) + bk_ref[h]
            k_s[h] = kh.astype(jnp.bfloat16)                      # (T, D)
            vh = jnp.dot(xb, wv_ref[h],
                         preferred_element_type=jnp.float32) + bv_ref[h]
            v_s[h] = vh.astype(jnp.bfloat16)                      # (T, D)

    # ---- this step's query tile (static fast-path when tq == T).
    if tq == T:
        x_tile = x_ref[0]                                         # (T, C) f32
    else:
        q_start = pl.multiple_of(qi * tq, tq)
        x_tile = x_ref[0, pl.ds(q_start, tq), :]                  # (tq, C) f32
    x_bf = x_tile.astype(jnp.bfloat16)                            # (tq, C) bf16

    bias = bias_ref[0]                                            # (1, T) f32

    # Contract the head dim of q against the head dim of k (no explicit .T).
    dn = (((1,), (1,)), ((), ()))

    heads_out = []
    for h in range(n_heads):
        # Per-tile, per-head Q projection: full-depth K=C contraction.
        qh = jnp.dot(x_bf, wq_ref[h],
                     preferred_element_type=jnp.float32) + bq_ref[h]   # (tq, D)

        s = jax.lax.dot_general(qh.astype(jnp.bfloat16), k_s[h], dn,
                                preferred_element_type=jnp.float32)    # (tq, T)
        s = s + bias
        s = s - jnp.max(s, axis=-1, keepdims=True)
        p = jnp.exp(s)
        denom = jnp.sum(p, axis=-1, keepdims=True)                     # (tq, 1)
        if approx_recip:
            inv = pl.reciprocal(denom, approx=True)
        else:
            inv = 1.0 / denom

        oh = jnp.dot(p.astype(jnp.bfloat16), v_s[h],
                     preferred_element_type=jnp.float32)               # (tq, D)
        # Normalize the small (tq, D) output instead of the (tq, T) probs.
        heads_out.append((oh * inv).astype(jnp.bfloat16))

    # Single full-depth output projection (head concat folded into one matmul).
    y = jnp.concatenate(heads_out, axis=-1)                            # (tq, C)
    proj = jnp.dot(y, wo_ref[...],
                   preferred_element_type=jnp.float32) + bo_ref[...]   # (tq, C)

    z = x_tile + proj                                                  # residual

    # LayerNorm (biased variance, like torch.nn.LayerNorm), all in f32.
    mean = jnp.mean(z, axis=-1, keepdims=True)
    var = jnp.mean((z - mean) * (z - mean), axis=-1, keepdims=True)
    zn = (z - mean) * jax.lax.rsqrt(var + eps)
    o_ref[0] = zn * gamma_ref[...] + beta_ref[...]


# ----------------------------------------------------------------------------
# Chip-aware sizing helpers
# ----------------------------------------------------------------------------
def _vmem_capacity_bytes():
    """Trace-time hardware query; defaults to 128 MiB (v5e/v6e) if unknown."""
    try:
        info = pltpu.get_tpu_info()
        cap = getattr(info, "vmem_capacity_bytes", None)
        if cap:
            return int(cap)
    except Exception:
        pass
    return 128 << 20


def _supports_pipeline_mode():
    if not hasattr(pl, "Buffered"):
        return False
    try:
        return "pipeline_mode" in inspect.signature(pl.BlockSpec).parameters
    except (TypeError, ValueError):
        return True


def _vmem_need_bytes(T, C, D, n_heads, tq, w_bufs):
    x_block = 2 * T * C * 4                      # double-buffered (1,T,C) f32
    bias_block = 2 * max(T, 128) * 8 * 4         # padded (1,1,T) f32
    out_block = 2 * tq * C * 4                   # double-buffered (1,tq,C) f32
    kv_scratch = 2 * n_heads * T * D * 2         # k_s + v_s bf16 (head-major)
    weights = w_bufs * (3 * C * C * 2            # wq/wk/wv (head-major) bf16
                        + 3 * n_heads * 8 * max(D, 128) * 4   # padded biases
                        + C * C * 2              # wo bf16
                        + 3 * C * 4)             # bo, gamma, beta
    temps = (2 * tq * T * 4                      # scores + exp
             + 2 * tq * C * 4                    # concat/proj/residual temps
             + T * C * 2 + T * D * 4)            # prologue temporaries
    return x_block + bias_block + out_block + kv_scratch + weights + temps


def _choose_tq(T, C, D, n_heads, w_bufs, budget):
    # Largest divisor-of-T query tile (multiple of 8) whose working set fits.
    candidates = [T]
    for d in range(min(T - 1, 1024), 7, -8):
        if T % d == 0:
            candidates.append(d)
    for tq in candidates:
        if _vmem_need_bytes(T, C, D, n_heads, tq, w_bufs) <= budget:
            return tq
    return candidates[-1]


# ----------------------------------------------------------------------------
# pallas_call builder
# ----------------------------------------------------------------------------
def _build_attention_call(B, T, C, n_heads, head_dim, tq, eps, approx_recip,
                          single_buffer_weights, vmem_limit):
    num_q = T // tq

    def const_spec(shape):
        index_map = lambda b, qi, _s=len(shape): (0,) * _s
        if single_buffer_weights:
            # Grid-invariant operand: a single VMEM buffer is enough (halves
            # weight VMEM; matters most on v7x's 64 MiB per TensorCore).
            return pl.BlockSpec(shape, index_map, pipeline_mode=pl.Buffered(1))
        return pl.BlockSpec(shape, index_map)

    D = head_dim
    in_specs = [
        pl.BlockSpec((1, T, C), lambda b, qi: (b, 0, 0)),   # x (invariant in qi)
        pl.BlockSpec((1, 1, T), lambda b, qi: (b, 0, 0)),   # additive mask bias
        const_spec((n_heads, C, D)),                        # Wq (scaled, bf16)
        const_spec((n_heads, 1, D)),                        # bq (scaled, f32)
        const_spec((n_heads, C, D)),                        # Wk
        const_spec((n_heads, 1, D)),                        # bk
        const_spec((n_heads, C, D)),                        # Wv
        const_spec((n_heads, 1, D)),                        # bv
        const_spec((C, C)),                                 # Wo (bf16)
        const_spec((1, C)),                                 # bo
        const_spec((1, C)),                                 # gamma
        const_spec((1, C)),                                 # beta
    ]
    out_specs = pl.BlockSpec((1, tq, C), lambda b, qi: (b, qi, 0))

    scratch_shapes = [
        pltpu.VMEM((n_heads, T, D), jnp.bfloat16),   # K, head-major, per row
        pltpu.VMEM((n_heads, T, D), jnp.bfloat16),   # V, head-major, per row
    ]

    # Advisory cost model so XLA schedules surrounding ops sensibly.
    flops = int(2 * B * T * C * C * 2                 # K, V projections
                + 2 * B * T * C * C                   # Q projection
                + 4 * B * n_heads * T * T * head_dim  # scores + PV
                + 2 * B * T * C * C)                  # output projection
    transcendentals = int(B * n_heads * T * T)        # softmax exp
    bytes_accessed = int(2 * B * T * C * 4            # x read + out write
                         + B * T * 4                  # mask bias
                         + 4 * C * C * 2 + 8 * C * 4) # weights + biases
    cost = pl.CostEstimate(flops=flops, transcendentals=transcendentals,
                           bytes_accessed=bytes_accessed)

    kernel = functools.partial(_attention_kernel, n_heads, head_dim, tq, eps,
                               approx_recip)

    return pl.pallas_call(
        kernel,
        out_shape=jax.ShapeDtypeStruct((B, T, C), jnp.float32),
        grid_spec=pltpu.PrefetchScalarGridSpec(
            num_scalar_prefetch=0,
            grid=(B, num_q),
            in_specs=in_specs,
            out_specs=out_specs,
            scratch_shapes=scratch_shapes,
        ),
        compiler_params=pltpu.CompilerParams(
            # qi must stay "arbitrary": the K/V scratch filled at qi == 0 is
            # reused by later qi steps of the same batch row.  The batch axis
            # is "parallel" so a 2-TC part can split it.
            dimension_semantics=("parallel", "arbitrary"),
            vmem_limit_bytes=int(vmem_limit),
        ),
        cost_estimate=cost,
    )


# ----------------------------------------------------------------------------
# Public wrapper
# ----------------------------------------------------------------------------
def _split_heads_weight(w, n_heads, head_dim):
    # (C_in, C_out) -> (n_heads, C_in, head_dim); head h owns output columns
    # [h*D, (h+1)*D).  Done once in JAX at trace time (cheap, outside kernel).
    c_in = w.shape[0]
    return jnp.transpose(w.reshape(c_in, n_heads, head_dim), (1, 0, 2))


def _split_heads_bias(b, n_heads, head_dim):
    # (1, C) -> (n_heads, 1, head_dim)
    return jnp.transpose(b.reshape(1, n_heads, head_dim), (1, 0, 2))


def attention_module(x, attention_mask, params, *, n_heads, eps,
                     approx_softmax_recip=True):
    """x: (B, T, C) f32; attention_mask: (B, T) bool (True = attend)."""
    B, T, C = x.shape
    assert C % n_heads == 0
    head_dim = C // n_heads

    single_buffer = _supports_pipeline_mode()
    w_bufs = 1 if single_buffer else 2

    # Chip-aware VMEM budget (v5e/v6e: 128 MiB, v7x: 64 MiB per TensorCore).
    capacity = _vmem_capacity_bytes()
    cap = int(min(capacity - (8 << 20), 110 << 20))

    tq = _choose_tq(T, C, head_dim, n_heads, w_bufs, cap)
    assert T % tq == 0
    need = _vmem_need_bytes(T, C, head_dim, n_heads, tq, w_bufs)
    vmem_limit = int(min(cap, max(32 << 20, int(1.25 * need))))

    # Additive mask bias (B, 1, T): 0 where attend, large negative otherwise.
    # (Rows with no attendable key get a uniform softmax instead of NaN.)
    mask_bias = jnp.where(attention_mask, 0.0, -1e30).astype(jnp.float32)
    mask_bias = mask_bias.reshape(B, 1, T)

    # Fold 1/sqrt(D) into the Q weights/bias (in f32, before the bf16 cast).
    scale = 1.0 / math.sqrt(head_dim)
    wq_h = _split_heads_weight(params["wq"].astype(jnp.float32) * scale,
                               n_heads, head_dim).astype(jnp.bfloat16)
    bq_h = _split_heads_bias(params["bq"].astype(jnp.float32) * scale,
                             n_heads, head_dim)
    wk_h = _split_heads_weight(params["wk"], n_heads, head_dim).astype(jnp.bfloat16)
    bk_h = _split_heads_bias(params["bk"].astype(jnp.float32), n_heads, head_dim)
    wv_h = _split_heads_weight(params["wv"], n_heads, head_dim).astype(jnp.bfloat16)
    bv_h = _split_heads_bias(params["bv"].astype(jnp.float32), n_heads, head_dim)
    wo = params["wo"].astype(jnp.bfloat16)
    bo = params["bo"].astype(jnp.float32)
    gamma = params["gamma"].astype(jnp.float32)
    beta = params["beta"].astype(jnp.float32)

    call = _build_attention_call(B, T, C, n_heads, head_dim, tq, eps,
                                 approx_softmax_recip, single_buffer,
                                 vmem_limit)
    return call(x.astype(jnp.float32), mask_bias,
                wq_h, bq_h, wk_h, bk_h, wv_h, bv_h,
                wo, bo, gamma, beta)


# ----------------------------------------------------------------------------
# Pure-JAX reference (matches the PyTorch module semantics)
# ----------------------------------------------------------------------------
def attention_module_ref(x, attention_mask, params, *, n_heads, eps):
    B, T, C = x.shape
    D = C // n_heads
    q = x @ params["wq"] + params["bq"][0]
    k = x @ params["wk"] + params["bk"][0]
    v = x @ params["wv"] + params["bv"][0]
    q = q.reshape(B, T, n_heads, D).transpose(0, 2, 1, 3)
    k = k.reshape(B, T, n_heads, D).transpose(0, 2, 1, 3)
    v = v.reshape(B, T, n_heads, D).transpose(0, 2, 1, 3)
    s = jnp.einsum("bhqd,bhkd->bhqk", q, k) / math.sqrt(D)
    bias = jnp.where(attention_mask, 0.0, -1e30)[:, None, None, :]
    p = jax.nn.softmax(s + bias, axis=-1)
    y = jnp.einsum("bhqk,bhkd->bhqd", p, v)
    y = y.transpose(0, 2, 1, 3).reshape(B, T, C)
    z = x + (y @ params["wo"] + params["bo"][0])
    mean = jnp.mean(z, -1, keepdims=True)
    var = jnp.mean((z - mean) ** 2, -1, keepdims=True)
    return (z - mean) / jnp.sqrt(var + eps) * params["gamma"][0] + params["beta"][0]


if __name__ == "__main__":
    B, T, C, H = 2, 8, 32, 4
    eps = 1e-12

    key = jax.random.PRNGKey(0)
    ks = jax.random.split(key, 12)
    scale = 0.1
    params = {
        "wq": scale * jax.random.normal(ks[0], (C, C), jnp.float32),
        "bq": scale * jax.random.normal(ks[1], (1, C), jnp.float32),
        "wk": scale * jax.random.normal(ks[2], (C, C), jnp.float32),
        "bk": scale * jax.random.normal(ks[3], (1, C), jnp.float32),
        "wv": scale * jax.random.normal(ks[4], (C, C), jnp.float32),
        "bv": scale * jax.random.normal(ks[5], (1, C), jnp.float32),
        "wo": scale * jax.random.normal(ks[6], (C, C), jnp.float32),
        "bo": scale * jax.random.normal(ks[7], (1, C), jnp.float32),
        "gamma": jnp.ones((1, C), jnp.float32),
        "beta": jnp.zeros((1, C), jnp.float32),
    }

    x = jax.random.normal(ks[8], (B, T, C), jnp.float32)
    # Boolean attention mask (B, T): each row has at least one attendable key.
    lengths = jnp.array([T, T - 3], dtype=jnp.int32)
    attention_mask = jnp.arange(T)[None, :] < lengths[:, None]   # (B, T) bool

    out = attention_module(x, attention_mask, params, n_heads=H, eps=eps)
    out = jax.block_until_ready(out)

    ref = attention_module_ref(x, attention_mask, params, n_heads=H, eps=eps)
    assert out.shape == (B, T, C)
    # Matmul operands are bf16 (f32 accumulation); softmax/LayerNorm stay f32,
    # so a loose-ish tolerance versus the pure-f32 reference.
    assert jnp.allclose(out, ref, atol=5e-2, rtol=5e-2), "mismatch vs reference"

    print("KERNEL_OK")
</pallas_src>

<mosaic_0001>
module attributes {stable_mosaic.version = 11 : i64} {
  func.func @_attention_kernel(%arg0: i32, %arg1: i32, %arg2: memref<1x8x32xf32, #tpu.memory_space<vmem>>, %arg3: memref<1x1x8xf32, #tpu.memory_space<vmem>>, %arg4: memref<4x32x8xbf16, #tpu.memory_space<vmem>>, %arg5: memref<4x1x8xf32, #tpu.memory_space<vmem>>, %arg6: memref<4x32x8xbf16, #tpu.memory_space<vmem>>, %arg7: memref<4x1x8xf32, #tpu.memory_space<vmem>>, %arg8: memref<4x32x8xbf16, #tpu.memory_space<vmem>>, %arg9: memref<4x1x8xf32, #tpu.memory_space<vmem>>, %arg10: memref<32x32xbf16, #tpu.memory_space<vmem>>, %arg11: memref<1x32xf32, #tpu.memory_space<vmem>>, %arg12: memref<1x32xf32, #tpu.memory_space<vmem>>, %arg13: memref<1x32xf32, #tpu.memory_space<vmem>>, %arg14: memref<1x8x32xf32, #tpu.memory_space<vmem>>, %arg15: memref<4x8x8xbf16, #tpu.memory_space<vmem>>, %arg16: memref<4x8x8xbf16, #tpu.memory_space<vmem>>) attributes {dimension_semantics = [#tpu.dimension_semantics<parallel>, #tpu.dimension_semantics<arbitrary>], iteration_bounds = array<i64: 2, 1>, scalar_prefetch = 0 : i64, scratch_operands = 2 : i64, tpu.core_type = #tpu.core_type<tc>, window_params = [{transform_indices = @transform_0, window_bounds = array<i64: 1, 8, 32>}, {transform_indices = @transform_1, window_bounds = array<i64: 1, 1, 8>}, {pipeline_mode = #tpu.pipeline_mode<synchronous>, transform_indices = @transform_2, window_bounds = array<i64: 4, 32, 8>}, {pipeline_mode = #tpu.pipeline_mode<synchronous>, transform_indices = @transform_3, window_bounds = array<i64: 4, 1, 8>}, {pipeline_mode = #tpu.pipeline_mode<synchronous>, transform_indices = @transform_4, window_bounds = array<i64: 4, 32, 8>}, {pipeline_mode = #tpu.pipeline_mode<synchronous>, transform_indices = @transform_5, window_bounds = array<i64: 4, 1, 8>}, {pipeline_mode = #tpu.pipeline_mode<synchronous>, transform_indices = @transform_6, window_bounds = array<i64: 4, 32, 8>}, {pipeline_mode = #tpu.pipeline_mode<synchronous>, transform_indices = @transform_7, window_bounds = array<i64: 4, 1, 8>}, {pipeline_mode = #tpu.pipeline_mode<synchronous>, transform_indices = @transform_8, window_bounds = array<i64: 32, 32>}, {pipeline_mode = #tpu.pipeline_mode<synchronous>, transform_indices = @transform_9, window_bounds = array<i64: 1, 32>}, {pipeline_mode = #tpu.pipeline_mode<synchronous>, transform_indices = @transform_10, window_bounds = array<i64: 1, 32>}, {pipeline_mode = #tpu.pipeline_mode<synchronous>, transform_indices = @transform_11, window_bounds = array<i64: 1, 32>}, {transform_indices = @transform_12, window_bounds = array<i64: 1, 8, 32>}]} {
    %c0_i32 = arith.constant 0 : i32
    %0 = arith.cmpi eq, %arg1, %c0_i32 : i32
    %1 = arith.extui %0 : i1 to i32
    %c0_i32_0 = arith.constant 0 : i32
    %2 = arith.cmpi ne, %1, %c0_i32_0 : i32
    scf.if %2 {
      %c0_87 = arith.constant 0 : index
      %c0_88 = arith.constant 0 : index
      %c0_89 = arith.constant 0 : index
      %156 = vector.load %arg2[%c0_87, %c0_88, %c0_89] : memref<1x8x32xf32, #tpu.memory_space<vmem>>, vector<1x8x32xf32>
      %157 = vector.shape_cast %156 : vector<1x8x32xf32> to vector<8x32xf32>
      %158 = arith.truncf %157 : vector<8x32xf32> to vector<8x32xbf16>
      %c0_90 = arith.constant 0 : index
      %c0_91 = arith.constant 0 : index
      %c0_92 = arith.constant 0 : index
      %159 = vector.load %arg6[%c0_90, %c0_91, %c0_92] : memref<4x32x8xbf16, #tpu.memory_space<vmem>>, vector<1x32x8xbf16>
      %160 = vector.shape_cast %159 : vector<1x32x8xbf16> to vector<32x8xbf16>
      %cst_93 = arith.constant dense<0.000000e+00> : vector<8x8xf32>
      %161 = tpu.matmul %158, %160, %cst_93 {dimension_numbers = #tpu.dot_dimension_numbers<[1], [0], [0], [1], [0, 0, 1, 1], [], []>} : vector<8x32xbf16>, vector<32x8xbf16>, vector<8x8xf32> -> vector<8x8xf32>
      %c0_94 = arith.constant 0 : index
      %c0_95 = arith.constant 0 : index
      %c0_96 = arith.constant 0 : index
      %162 = vector.load %arg7[%c0_94, %c0_95, %c0_96] : memref<4x1x8xf32, #tpu.memory_space<vmem>>, vector<1x1x8xf32>
      %163 = vector.shape_cast %162 : vector<1x1x8xf32> to vector<1x8xf32>
      %164 = vector.broadcast %163 : vector<1x8xf32> to vector<8x8xf32>
      %165 = arith.addf %161, %164 : vector<8x8xf32>
      %166 = arith.truncf %165 : vector<8x8xf32> to vector<8x8xbf16>
      %c0_97 = arith.constant 0 : index
      %c0_98 = arith.constant 0 : index
      %c0_99 = arith.constant 0 : index
      %167 = vector.load %arg15[%c0_97, %c0_98, %c0_99] : memref<4x8x8xbf16, #tpu.memory_space<vmem>>, vector<1x8x8xbf16>
      %168 = vector.shape_cast %167 : vector<1x8x8xbf16> to vector<8x8xbf16>
      %169 = vector.shape_cast %166 : vector<8x8xbf16> to vector<1x8x8xbf16>
      tpu.vector_store %arg15[%c0_97, %c0_98, %c0_99], %169 {strides = array<i32>} : memref<4x8x8xbf16, #tpu.memory_space<vmem>>, vector<1x8x8xbf16>,
      %c0_100 = arith.constant 0 : index
      %c0_101 = arith.constant 0 : index
      %c0_102 = arith.constant 0 : index
      %170 = vector.load %arg8[%c0_100, %c0_101, %c0_102] : memref<4x32x8xbf16, #tpu.memory_space<vmem>>, vector<1x32x8xbf16>
      %171 = vector.shape_cast %170 : vector<1x32x8xbf16> to vector<32x8xbf16>
      %cst_103 = arith.constant dense<0.000000e+00> : vector<8x8xf32>
      %172 = tpu.matmul %158, %171, %cst_103 {dimension_numbers = #tpu.dot_dimension_numbers<[1], [0], [0], [1], [0, 0, 1, 1], [], []>} : vector<8x32xbf16>, vector<32x8xbf16>, vector<8x8xf32> -> vector<8x8xf32>
      %c0_104 = arith.constant 0 : index
      %c0_105 = arith.constant 0 : index
      %c0_106 = arith.constant 0 : index
      %173 = vector.load %arg9[%c0_104, %c0_105, %c0_106] : memref<4x1x8xf32, #tpu.memory_space<vmem>>, vector<1x1x8xf32>
      %174 = vector.shape_cast %173 : vector<1x1x8xf32> to vector<1x8xf32>
      %175 = vector.broadcast %174 : vector<1x8xf32> to vector<8x8xf32>
      %176 = arith.addf %172, %175 : vector<8x8xf32>
      %177 = arith.truncf %176 : vector<8x8xf32> to vector<8x8xbf16>
      %c0_107 = arith.constant 0 : index
      %c0_108 = arith.constant 0 : index
      %c0_109 = arith.constant 0 : index
      %178 = vector.load %arg16[%c0_107, %c0_108, %c0_109] : memref<4x8x8xbf16, #tpu.memory_space<vmem>>, vector<1x8x8xbf16>
      %179 = vector.shape_cast %178 : vector<1x8x8xbf16> to vector<8x8xbf16>
      %180 = vector.shape_cast %177 : vector<8x8xbf16> to vector<1x8x8xbf16>
      tpu.vector_store %arg16[%c0_107, %c0_108, %c0_109], %180 {strides = array<i32>} : memref<4x8x8xbf16, #tpu.memory_space<vmem>>, vector<1x8x8xbf16>,
      %c1_110 = arith.constant 1 : index
      %c0_111 = arith.constant 0 : index
      %c0_112 = arith.constant 0 : index
      %181 = vector.load %arg6[%c1_110, %c0_111, %c0_112] : memref<4x32x8xbf16, #tpu.memory_space<vmem>>, vector<1x32x8xbf16>
      %182 = vector.shape_cast %181 : vector<1x32x8xbf16> to vector<32x8xbf16>
      %cst_113 = arith.constant dense<0.000000e+00> : vector<8x8xf32>
      %183 = tpu.matmul %158, %182, %cst_113 {dimension_numbers = #tpu.dot_dimension_numbers<[1], [0], [0], [1], [0, 0, 1, 1], [], []>} : vector<8x32xbf16>, vector<32x8xbf16>, vector<8x8xf32> -> vector<8x8xf32>
      %c1_114 = arith.constant 1 : index
      %c0_115 = arith.constant 0 : index
      %c0_116 = arith.constant 0 : index
      %184 = vector.load %arg7[%c1_114, %c0_115, %c0_116] : memref<4x1x8xf32, #tpu.memory_space<vmem>>, vector<1x1x8xf32>
      %185 = vector.shape_cast %184 : vector<1x1x8xf32> to vector<1x8xf32>
      %186 = vector.broadcast %185 : vector<1x8xf32> to vector<8x8xf32>
      %187 = arith.addf %183, %186 : vector<8x8xf32>
      %188 = arith.truncf %187 : vector<8x8xf32> to vector<8x8xbf16>
      %c1_117 = arith.constant 1 : index
      %c0_118 = arith.constant 0 : index
      %c0_119 = arith.constant 0 : index
      %189 = vector.load %arg15[%c1_117, %c0_118, %c0_119] : memref<4x8x8xbf16, #tpu.memory_space<vmem>>, vector<1x8x8xbf16>
      %190 = vector.shape_cast %189 : vector<1x8x8xbf16> to vector<8x8xbf16>
      %191 = vector.shape_cast %188 : vector<8x8xbf16> to vector<1x8x8xbf16>
      tpu.vector_store %arg15[%c1_117, %c0_118, %c0_119], %191 {strides = array<i32>} : memref<4x8x8xbf16, #tpu.memory_space<vmem>>, vector<1x8x8xbf16>,
      %c1_120 = arith.constant 1 : index
      %c0_121 = arith.constant 0 : index
      %c0_122 = arith.constant 0 : index
      %192 = vector.load %arg8[%c1_120, %c0_121, %c0_122] : memref<4x32x8xbf16, #tpu.memory_space<vmem>>, vector<1x32x8xbf16>
      %193 = vector.shape_cast %192 : vector<1x32x8xbf16> to vector<32x8xbf16>
      %cst_123 = arith.constant dense<0.000000e+00> : vector<8x8xf32>
      %194 = tpu.matmul %158, %193, %cst_123 {dimension_numbers = #tpu.dot_dimension_numbers<[1], [0], [0], [1], [0, 0, 1, 1], [], []>} : vector<8x32xbf16>, vector<32x8xbf16>, vector<8x8xf32> -> vector<8x8xf32>
      %c1_124 = arith.constant 1 : index
      %c0_125 = arith.constant 0 : index
      %c0_126 = arith.constant 0 : index
      %195 = vector.load %arg9[%c1_124, %c0_125, %c0_126] : memref<4x1x8xf32, #tpu.memory_space<vmem>>, vector<1x1x8xf32>
      %196 = vector.shape_cast %195 : vector<1x1x8xf32> to vector<1x8xf32>
      %197 = vector.broadcast %196 : vector<1x8xf32> to vector<8x8xf32>
      %198 = arith.addf %194, %197 : vector<8x8xf32>
      %199 = arith.truncf %198 : vector<8x8xf32> to vector<8x8xbf16>
      %c1_127 = arith.constant 1 : index
      %c0_128 = arith.constant 0 : index
      %c0_129 = arith.constant 0 : index
      %200 = vector.load %arg16[%c1_127, %c0_128, %c0_129] : memref<4x8x8xbf16, #tpu.memory_space<vmem>>, vector<1x8x8xbf16>
      %201 = vector.shape_cast %200 : vector<1x8x8xbf16> to vector<8x8xbf16>
      %202 = vector.shape_cast %199 : vector<8x8xbf16> to vector<1x8x8xbf16>
      tpu.vector_store %arg16[%c1_127, %c0_128, %c0_129], %202 {strides = array<i32>} : memref<4x8x8xbf16, #tpu.memory_space<vmem>>, vector<1x8x8xbf16>,
      %c2_130 = arith.constant 2 : index
      %c0_131 = arith.constant 0 : index
      %c0_132 = arith.constant 0 : index
      %203 = vector.load %arg6[%c2_130, %c0_131, %c0_132] : memref<4x32x8xbf16, #tpu.memory_space<vmem>>, vector<1x32x8xbf16>
      %204 = vector.shape_cast %203 : vector<1x32x8xbf16> to vector<32x8xbf16>
      %cst_133 = arith.constant dense<0.000000e+00> : vector<8x8xf32>
      %205 = tpu.matmul %158, %204, %cst_133 {dimension_numbers = #tpu.dot_dimension_numbers<[1], [0], [0], [1], [0, 0, 1, 1], [], []>} : vector<8x32xbf16>, vector<32x8xbf16>, vector<8x8xf32> -> vector<8x8xf32>
      %c2_134 = arith.constant 2 : index
      %c0_135 = arith.constant 0 : index
      %c0_136 = arith.constant 0 : index
      %206 = vector.load %arg7[%c2_134, %c0_135, %c0_136] : memref<4x1x8xf32, #tpu.memory_space<vmem>>, vector<1x1x8xf32>
      %207 = vector.shape_cast %206 : vector<1x1x8xf32> to vector<1x8xf32>
      %208 = vector.broadcast %207 : vector<1x8xf32> to vector<8x8xf32>
      %209 = arith.addf %205, %208 : vector<8x8xf32>
      %210 = arith.truncf %209 : vector<8x8xf32> to vector<8x8xbf16>
      %c2_137 = arith.constant 2 : index
      %c0_138 = arith.constant 0 : index
      %c0_139 = arith.constant 0 : index
      %211 = vector.load %arg15[%c2_137, %c0_138, %c0_139] : memref<4x8x8xbf16, #tpu.memory_space<vmem>>, vector<1x8x8xbf16>
      %212 = vector.shape_cast %211 : vector<1x8x8xbf16> to vector<8x8xbf16>
      %213 = vector.shape_cast %210 : vector<8x8xbf16> to vector<1x8x8xbf16>
      tpu.vector_store %arg15[%c2_137, %c0_138, %c0_139], %213 {strides = array<i32>} : memref<4x8x8xbf16, #tpu.memory_space<vmem>>, vector<1x8x8xbf16>,
      %c2_140 = arith.constant 2 : index
      %c0_141 = arith.constant 0 : index
      %c0_142 = arith.constant 0 : index
      %214 = vector.load %arg8[%c2_140, %c0_141, %c0_142] : memref<4x32x8xbf16, #tpu.memory_space<vmem>>, vector<1x32x8xbf16>
      %215 = vector.shape_cast %214 : vector<1x32x8xbf16> to vector<32x8xbf16>
      %cst_143 = arith.constant dense<0.000000e+00> : vector<8x8xf32>
      %216 = tpu.matmul %158, %215, %cst_143 {dimension_numbers = #tpu.dot_dimension_numbers<[1], [0], [0], [1], [0, 0, 1, 1], [], []>} : vector<8x32xbf16>, vector<32x8xbf16>, vector<8x8xf32> -> vector<8x8xf32>
      %c2_144 = arith.constant 2 : index
      %c0_145 = arith.constant 0 : index
      %c0_146 = arith.constant 0 : index
      %217 = vector.load %arg9[%c2_144, %c0_145, %c0_146] : memref<4x1x8xf32, #tpu.memory_space<vmem>>, vector<1x1x8xf32>
      %218 = vector.shape_cast %217 : vector<1x1x8xf32> to vector<1x8xf32>
      %219 = vector.broadcast %218 : vector<1x8xf32> to vector<8x8xf32>
      %220 = arith.addf %216, %219 : vector<8x8xf32>
      %221 = arith.truncf %220 : vector<8x8xf32> to vector<8x8xbf16>
      %c2_147 = arith.constant 2 : index
      %c0_148 = arith.constant 0 : index
      %c0_149 = arith.constant 0 : index
      %222 = vector.load %arg16[%c2_147, %c0_148, %c0_149] : memref<4x8x8xbf16, #tpu.memory_space<vmem>>, vector<1x8x8xbf16>
      %223 = vector.shape_cast %222 : vector<1x8x8xbf16> to vector<8x8xbf16>
      %224 = vector.shape_cast %221 : vector<8x8xbf16> to vector<1x8x8xbf16>
      tpu.vector_store %arg16[%c2_147, %c0_148, %c0_149], %224 {strides = array<i32>} : memref<4x8x8xbf16, #tpu.memory_space<vmem>>, vector<1x8x8xbf16>,
      %c3_150 = arith.constant 3 : index
      %c0_151 = arith.constant 0 : index
      %c0_152 = arith.constant 0 : index
      %225 = vector.load %arg6[%c3_150, %c0_151, %c0_152] : memref<4x32x8xbf16, #tpu.memory_space<vmem>>, vector<1x32x8xbf16>
      %226 = vector.shape_cast %225 : vector<1x32x8xbf16> to vector<32x8xbf16>
      %cst_153 = arith.constant dense<0.000000e+00> : vector<8x8xf32>
      %227 = tpu.matmul %158, %226, %cst_153 {dimension_numbers = #tpu.dot_dimension_numbers<[1], [0], [0], [1], [0, 0, 1, 1], [], []>} : vector<8x32xbf16>, vector<32x8xbf16>, vector<8x8xf32> -> vector<8x8xf32>
      %c3_154 = arith.constant 3 : index
      %c0_155 = arith.constant 0 : index
      %c0_156 = arith.constant 0 : index
      %228 = vector.load %arg7[%c3_154, %c0_155, %c0_156] : memref<4x1x8xf32, #tpu.memory_space<vmem>>, vector<1x1x8xf32>
      %229 = vector.shape_cast %228 : vector<1x1x8xf32> to vector<1x8xf32>
      %230 = vector.broadcast %229 : vector<1x8xf32> to vector<8x8xf32>
      %231 = arith.addf %227, %230 : vector<8x8xf32>
      %232 = arith.truncf %231 : vector<8x8xf32> to vector<8x8xbf16>
      %c3_157 = arith.constant 3 : index
      %c0_158 = arith.constant 0 : index
      %c0_159 = arith.constant 0 : index
      %233 = vector.load %arg15[%c3_157, %c0_158, %c0_159] : memref<4x8x8xbf16, #tpu.memory_space<vmem>>, vector<1x8x8xbf16>
      %234 = vector.shape_cast %233 : vector<1x8x8xbf16> to vector<8x8xbf16>
      %235 = vector.shape_cast %232 : vector<8x8xbf16> to vector<1x8x8xbf16>
      tpu.vector_store %arg15[%c3_157, %c0_158, %c0_159], %235 {strides = array<i32>} : memref<4x8x8xbf16, #tpu.memory_space<vmem>>, vector<1x8x8xbf16>,
      %c3_160 = arith.constant 3 : index
      %c0_161 = arith.constant 0 : index
      %c0_162 = arith.constant 0 : index
      %236 = vector.load %arg8[%c3_160, %c0_161, %c0_162] : memref<4x32x8xbf16, #tpu.memory_space<vmem>>, vector<1x32x8xbf16>
      %237 = vector.shape_cast %236 : vector<1x32x8xbf16> to vector<32x8xbf16>
      %cst_163 = arith.constant dense<0.000000e+00> : vector<8x8xf32>
      %238 = tpu.matmul %158, %237, %cst_163 {dimension_numbers = #tpu.dot_dimension_numbers<[1], [0], [0], [1], [0, 0, 1, 1], [], []>} : vector<8x32xbf16>, vector<32x8xbf16>, vector<8x8xf32> -> vector<8x8xf32>
      %c3_164 = arith.constant 3 : index
      %c0_165 = arith.constant 0 : index
      %c0_166 = arith.constant 0 : index
      %239 = vector.load %arg9[%c3_164, %c0_165, %c0_166] : memref<4x1x8xf32, #tpu.memory_space<vmem>>, vector<1x1x8xf32>
      %240 = vector.shape_cast %239 : vector<1x1x8xf32> to vector<1x8xf32>
      %241 = vector.broadcast %240 : vector<1x8xf32> to vector<8x8xf32>
      %242 = arith.addf %238, %241 : vector<8x8xf32>
      %243 = arith.truncf %242 : vector<8x8xf32> to vector<8x8xbf16>
      %c3_167 = arith.constant 3 : index
      %c0_168 = arith.constant 0 : index
      %c0_169 = arith.constant 0 : index
      %244 = vector.load %arg16[%c3_167, %c0_168, %c0_169] : memref<4x8x8xbf16, #tpu.memory_space<vmem>>, vector<1x8x8xbf16>
      %245 = vector.shape_cast %244 : vector<1x8x8xbf16> to vector<8x8xbf16>
      %246 = vector.shape_cast %243 : vector<8x8xbf16> to vector<1x8x8xbf16>
      tpu.vector_store %arg16[%c3_167, %c0_168, %c0_169], %246 {strides = array<i32>} : memref<4x8x8xbf16, #tpu.memory_space<vmem>>, vector<1x8x8xbf16>,
    } else {
    }
    %c0 = arith.constant 0 : index
    %c0_1 = arith.constant 0 : index
    %c0_2 = arith.constant 0 : index
    %3 = vector.load %arg2[%c0, %c0_1, %c0_2] : memref<1x8x32xf32, #tpu.memory_space<vmem>>, vector<1x8x32xf32>
    %4 = vector.shape_cast %3 : vector<1x8x32xf32> to vector<8x32xf32>
    %5 = arith.truncf %4 : vector<8x32xf32> to vector<8x32xbf16>
    %c0_3 = arith.constant 0 : index
    %c0_4 = arith.constant 0 : index
    %c0_5 = arith.constant 0 : index
    %6 = vector.load %arg3[%c0_3, %c0_4, %c0_5] : memref<1x1x8xf32, #tpu.memory_space<vmem>>, vector<1x1x8xf32>
    %7 = vector.shape_cast %6 : vector<1x1x8xf32> to vector<1x8xf32>
    %c0_6 = arith.constant 0 : index
    %c0_7 = arith.constant 0 : index
    %c0_8 = arith.constant 0 : index
    %8 = vector.load %arg4[%c0_6, %c0_7, %c0_8] : memref<4x32x8xbf16, #tpu.memory_space<vmem>>, vector<1x32x8xbf16>
    %9 = vector.shape_cast %8 : vector<1x32x8xbf16> to vector<32x8xbf16>
    %cst = arith.constant dense<0.000000e+00> : vector<8x8xf32>
    %10 = tpu.matmul %5, %9, %cst {dimension_numbers = #tpu.dot_dimension_numbers<[1], [0], [0], [1], [0, 0, 1, 1], [], []>} : vector<8x32xbf16>, vector<32x8xbf16>, vector<8x8xf32> -> vector<8x8xf32>
    %c0_9 = arith.constant 0 : index
    %c0_10 = arith.constant 0 : index
    %c0_11 = arith.constant 0 : index
    %11 = vector.load %arg5[%c0_9, %c0_10, %c0_11] : memref<4x1x8xf32, #tpu.memory_space<vmem>>, vector<1x1x8xf32>
    %12 = vector.shape_cast %11 : vector<1x1x8xf32> to vector<1x8xf32>
    %13 = vector.broadcast %12 : vector<1x8xf32> to vector<8x8xf32>
    %14 = arith.addf %10, %13 : vector<8x8xf32>
    %15 = arith.truncf %14 : vector<8x8xf32> to vector<8x8xbf16>
    %c0_12 = arith.constant 0 : index
    %c0_13 = arith.constant 0 : index
    %c0_14 = arith.constant 0 : index
    %16 = vector.load %arg15[%c0_12, %c0_13, %c0_14] : memref<4x8x8xbf16, #tpu.memory_space<vmem>>, vector<1x8x8xbf16>
    %17 = vector.shape_cast %16 : vector<1x8x8xbf16> to vector<8x8xbf16>
    %cst_15 = arith.constant dense<0.000000e+00> : vector<8x8xf32>
    %18 = tpu.matmul %15, %17, %cst_15 {dimension_numbers = #tpu.dot_dimension_numbers<[1], [1], [0], [0], [0, 0, 1, 0], [], []>} : vector<8x8xbf16>, vector<8x8xbf16>, vector<8x8xf32> -> vector<8x8xf32>
    %19 = vector.broadcast %7 : vector<1x8xf32> to vector<8x8xf32>
    %20 = arith.addf %18, %19 : vector<8x8xf32>
    %cst_16 = arith.constant dense<0xFF800000> : vector<8xf32>
    %21 = vector.multi_reduction <maximumf>, %20, %cst_16 [1] : vector<8x8xf32> to vector<8xf32>
    %22 = vector.shape_cast %21 : vector<8xf32> to vector<8x1xf32>
    %23 = vector.broadcast %22 : vector<8x1xf32> to vector<8x8xf32>
    %24 = arith.subf %20, %23 : vector<8x8xf32>
    %25 = math.exp %24 : vector<8x8xf32>
    %cst_17 = arith.constant dense<0.000000e+00> : vector<8xf32>
    %26 = vector.multi_reduction <add>, %25, %cst_17 [1] : vector<8x8xf32> to vector<8xf32>
    %27 = vector.shape_cast %26 : vector<8xf32> to vector<8x1xf32>
    %28 = tpu.reciprocal %27 {approx = true} : vector<8x1xf32> -> vector<8x1xf32>
    %29 = arith.truncf %25 : vector<8x8xf32> to vector<8x8xbf16>
    %c0_18 = arith.constant 0 : index
    %c0_19 = arith.constant 0 : index
    %c0_20 = arith.constant 0 : index
    %30 = vector.load %arg16[%c0_18, %c0_19, %c0_20] : memref<4x8x8xbf16, #tpu.memory_space<vmem>>, vector<1x8x8xbf16>
    %31 = vector.shape_cast %30 : vector<1x8x8xbf16> to vector<8x8xbf16>
    %cst_21 = arith.constant dense<0.000000e+00> : vector<8x8xf32>
    %32 = tpu.matmul %29, %31, %cst_21 {dimension_numbers = #tpu.dot_dimension_numbers<[1], [0], [0], [1], [0, 0, 1, 1], [], []>} : vector<8x8xbf16>, vector<8x8xbf16>, vector<8x8xf32> -> vector<8x8xf32>
    %33 = vector.broadcast %28 : vector<8x1xf32> to vector<8x8xf32>
    %34 = arith.mulf %32, %33 : vector<8x8xf32>
    %35 = arith.truncf %34 : vector<8x8xf32> to vector<8x8xbf16>
    %c1 = arith.constant 1 : index
    %c0_22 = arith.constant 0 : index
    %c0_23 = arith.constant 0 : index
    %36 = vector.load %arg4[%c1, %c0_22, %c0_23] : memref<4x32x8xbf16, #tpu.memory_space<vmem>>, vector<1x32x8xbf16>
    %37 = vector.shape_cast %36 : vector<1x32x8xbf16> to vector<32x8xbf16>
    %cst_24 = arith.constant dense<0.000000e+00> : vector<8x8xf32>
    %38 = tpu.matmul %5, %37, %cst_24 {dimension_numbers = #tpu.dot_dimension_numbers<[1], [0], [0], [1], [0, 0, 1, 1], [], []>} : vector<8x32xbf16>, vector<32x8xbf16>, vector<8x8xf32> -> vector<8x8xf32>
    %c1_25 = arith.constant 1 : index
    %c0_26 = arith.constant 0 : index
    %c0_27 = arith.constant 0 : index
    %39 = vector.load %arg5[%c1_25, %c0_26, %c0_27] : memref<4x1x8xf32, #tpu.memory_space<vmem>>, vector<1x1x8xf32>
    %40 = vector.shape_cast %39 : vector<1x1x8xf32> to vector<1x8xf32>
    %41 = vector.broadcast %40 : vector<1x8xf32> to vector<8x8xf32>
    %42 = arith.addf %38, %41 : vector<8x8xf32>
    %43 = arith.truncf %42 : vector<8x8xf32> to vector<8x8xbf16>
    %c1_28 = arith.constant 1 : index
    %c0_29 = arith.constant 0 : index
    %c0_30 = arith.constant 0 : index
    %44 = vector.load %arg15[%c1_28, %c0_29, %c0_30] : memref<4x8x8xbf16, #tpu.memory_space<vmem>>, vector<1x8x8xbf16>
    %45 = vector.shape_cast %44 : vector<1x8x8xbf16> to vector<8x8xbf16>
    %cst_31 = arith.constant dense<0.000000e+00> : vector<8x8xf32>
    %46 = tpu.matmul %43, %45, %cst_31 {dimension_numbers = #tpu.dot_dimension_numbers<[1], [1], [0], [0], [0, 0, 1, 0], [], []>} : vector<8x8xbf16>, vector<8x8xbf16>, vector<8x8xf32> -> vector<8x8xf32>
    %47 = vector.broadcast %7 : vector<1x8xf32> to vector<8x8xf32>
    %48 = arith.addf %46, %47 : vector<8x8xf32>
    %cst_32 = arith.constant dense<0xFF800000> : vector<8xf32>
    %49 = vector.multi_reduction <maximumf>, %48, %cst_32 [1] : vector<8x8xf32> to vector<8xf32>
    %50 = vector.shape_cast %49 : vector<8xf32> to vector<8x1xf32>
    %51 = vector.broadcast %50 : vector<8x1xf32> to vector<8x8xf32>
    %52 = arith.subf %48, %51 : vector<8x8xf32>
    %53 = math.exp %52 : vector<8x8xf32>
    %cst_33 = arith.constant dense<0.000000e+00> : vector<8xf32>
    %54 = vector.multi_reduction <add>, %53, %cst_33 [1] : vector<8x8xf32> to vector<8xf32>
    %55 = vector.shape_cast %54 : vector<8xf32> to vector<8x1xf32>
    %56 = tpu.reciprocal %55 {approx = true} : vector<8x1xf32> -> vector<8x1xf32>
    %57 = arith.truncf %53 : vector<8x8xf32> to vector<8x8xbf16>
    %c1_34 = arith.constant 1 : index
    %c0_35 = arith.constant 0 : index
    %c0_36 = arith.constant 0 : index
    %58 = vector.load %arg16[%c1_34, %c0_35, %c0_36] : memref<4x8x8xbf16, #tpu.memory_space<vmem>>, vector<1x8x8xbf16>
    %59 = vector.shape_cast %58 : vector<1x8x8xbf16> to vector<8x8xbf16>
    %cst_37 = arith.constant dense<0.000000e+00> : vector<8x8xf32>
    %60 = tpu.matmul %57, %59, %cst_37 {dimension_numbers = #tpu.dot_dimension_numbers<[1], [0], [0], [1], [0, 0, 1, 1], [], []>} : vector<8x8xbf16>, vector<8x8xbf16>, vector<8x8xf32> -> vector<8x8xf32>
    %61 = vector.broadcast %56 : vector<8x1xf32> to vector<8x8xf32>
    %62 = arith.mulf %60, %61 : vector<8x8xf32>
    %63 = arith.truncf %62 : vector<8x8xf32> to vector<8x8xbf16>
    %c2 = arith.constant 2 : index
    %c0_38 = arith.constant 0 : index
    %c0_39 = arith.constant 0 : index
    %64 = vector.load %arg4[%c2, %c0_38, %c0_39] : memref<4x32x8xbf16, #tpu.memory_space<vmem>>, vector<1x32x8xbf16>
    %65 = vector.shape_cast %64 : vector<1x32x8xbf16> to vector<32x8xbf16>
    %cst_40 = arith.constant dense<0.000000e+00> : vector<8x8xf32>
    %66 = tpu.matmul %5, %65, %cst_40 {dimension_numbers = #tpu.dot_dimension_numbers<[1], [0], [0], [1], [0, 0, 1, 1], [], []>} : vector<8x32xbf16>, vector<32x8xbf16>, vector<8x8xf32> -> vector<8x8xf32>
    %c2_41 = arith.constant 2 : index
    %c0_42 = arith.constant 0 : index
    %c0_43 = arith.constant 0 : index
    %67 = vector.load %arg5[%c2_41, %c0_42, %c0_43] : memref<4x1x8xf32, #tpu.memory_space<vmem>>, vector<1x1x8xf32>
    %68 = vector.shape_cast %67 : vector<1x1x8xf32> to vector<1x8xf32>
    %69 = vector.broadcast %68 : vector<1x8xf32> to vector<8x8xf32>
    %70 = arith.addf %66, %69 : vector<8x8xf32>
    %71 = arith.truncf %70 : vector<8x8xf32> to vector<8x8xbf16>
    %c2_44 = arith.constant 2 : index
    %c0_45 = arith.constant 0 : index
    %c0_46 = arith.constant 0 : index
    %72 = vector.load %arg15[%c2_44, %c0_45, %c0_46] : memref<4x8x8xbf16, #tpu.memory_space<vmem>>, vector<1x8x8xbf16>
    %73 = vector.shape_cast %72 : vector<1x8x8xbf16> to vector<8x8xbf16>
    %cst_47 = arith.constant dense<0.000000e+00> : vector<8x8xf32>
    %74 = tpu.matmul %71, %73, %cst_47 {dimension_numbers = #tpu.dot_dimension_numbers<[1], [1], [0], [0], [0, 0, 1, 0], [], []>} : vector<8x8xbf16>, vector<8x8xbf16>, vector<8x8xf32> -> vector<8x8xf32>
    %75 = vector.broadcast %7 : vector<1x8xf32> to vector<8x8xf32>
    %76 = arith.addf %74, %75 : vector<8x8xf32>
    %cst_48 = arith.constant dense<0xFF800000> : vector<8xf32>
    %77 = vector.multi_reduction <maximumf>, %76, %cst_48 [1] : vector<8x8xf32> to vector<8xf32>
    %78 = vector.shape_cast %77 : vector<8xf32> to vector<8x1xf32>
    %79 = vector.broadcast %78 : vector<8x1xf32> to vector<8x8xf32>
    %80 = arith.subf %76, %79 : vector<8x8xf32>
    %81 = math.exp %80 : vector<8x8xf32>
    %cst_49 = arith.constant dense<0.000000e+00> : vector<8xf32>
    %82 = vector.multi_reduction <add>, %81, %cst_49 [1] : vector<8x8xf32> to vector<8xf32>
    %83 = vector.shape_cast %82 : vector<8xf32> to vector<8x1xf32>
    %84 = tpu.reciprocal %83 {approx = true} : vector<8x1xf32> -> vector<8x1xf32>
    %85 = arith.truncf %81 : vector<8x8xf32> to vector<8x8xbf16>
    %c2_50 = arith.constant 2 : index
    %c0_51 = arith.constant 0 : index
    %c0_52 = arith.constant 0 : index
    %86 = vector.load %arg16[%c2_50, %c0_51, %c0_52] : memref<4x8x8xbf16, #tpu.memory_space<vmem>>, vector<1x8x8xbf16>
    %87 = vector.shape_cast %86 : vector<1x8x8xbf16> to vector<8x8xbf16>
    %cst_53 = arith.constant dense<0.000000e+00> : vector<8x8xf32>
    %88 = tpu.matmul %85, %87, %cst_53 {dimension_numbers = #tpu.dot_dimension_numbers<[1], [0], [0], [1], [0, 0, 1, 1], [], []>} : vector<8x8xbf16>, vector<8x8xbf16>, vector<8x8xf32> -> vector<8x8xf32>
    %89 = vector.broadcast %84 : vector<8x1xf32> to vector<8x8xf32>
    %90 = arith.mulf %88, %89 : vector<8x8xf32>
    %91 = arith.truncf %90 : vector<8x8xf32> to vector<8x8xbf16>
    %c3 = arith.constant 3 : index
    %c0_54 = arith.constant 0 : index
    %c0_55 = arith.constant 0 : index
    %92 = vector.load %arg4[%c3, %c0_54, %c0_55] : memref<4x32x8xbf16, #tpu.memory_space<vmem>>, vector<1x32x8xbf16>
    %93 = vector.shape_cast %92 : vector<1x32x8xbf16> to vector<32x8xbf16>
    %cst_56 = arith.constant dense<0.000000e+00> : vector<8x8xf32>
    %94 = tpu.matmul %5, %93, %cst_56 {dimension_numbers = #tpu.dot_dimension_numbers<[1], [0], [0], [1], [0, 0, 1, 1], [], []>} : vector<8x32xbf16>, vector<32x8xbf16>, vector<8x8xf32> -> vector<8x8xf32>
    %c3_57 = arith.constant 3 : index
    %c0_58 = arith.constant 0 : index
    %c0_59 = arith.constant 0 : index
    %95 = vector.load %arg5[%c3_57, %c0_58, %c0_59] : memref<4x1x8xf32, #tpu.memory_space<vmem>>, vector<1x1x8xf32>
    %96 = vector.shape_cast %95 : vector<1x1x8xf32> to vector<1x8xf32>
    %97 = vector.broadcast %96 : vector<1x8xf32> to vector<8x8xf32>
    %98 = arith.addf %94, %97 : vector<8x8xf32>
    %99 = arith.truncf %98 : vector<8x8xf32> to vector<8x8xbf16>
    %c3_60 = arith.constant 3 : index
    %c0_61 = arith.constant 0 : index
    %c0_62 = arith.constant 0 : index
    %100 = vector.load %arg15[%c3_60, %c0_61, %c0_62] : memref<4x8x8xbf16, #tpu.memory_space<vmem>>, vector<1x8x8xbf16>
    %101 = vector.shape_cast %100 : vector<1x8x8xbf16> to vector<8x8xbf16>
    %cst_63 = arith.constant dense<0.000000e+00> : vector<8x8xf32>
    %102 = tpu.matmul %99, %101, %cst_63 {dimension_numbers = #tpu.dot_dimension_numbers<[1], [1], [0], [0], [0, 0, 1, 0], [], []>} : vector<8x8xbf16>, vector<8x8xbf16>, vector<8x8xf32> -> vector<8x8xf32>
    %103 = vector.broadcast %7 : vector<1x8xf32> to vector<8x8xf32>
    %104 = arith.addf %102, %103 : vector<8x8xf32>
    %cst_64 = arith.constant dense<0xFF800000> : vector<8xf32>
    %105 = vector.multi_reduction <maximumf>, %104, %cst_64 [1] : vector<8x8xf32> to vector<8xf32>
    %106 = vector.shape_cast %105 : vector<8xf32> to vector<8x1xf32>
    %107 = vector.broadcast %106 : vector<8x1xf32> to vector<8x8xf32>
    %108 = arith.subf %104, %107 : vector<8x8xf32>
    %109 = math.exp %108 : vector<8x8xf32>
    %cst_65 = arith.constant dense<0.000000e+00> : vector<8xf32>
    %110 = vector.multi_reduction <add>, %109, %cst_65 [1] : vector<8x8xf32> to vector<8xf32>
    %111 = vector.shape_cast %110 : vector<8xf32> to vector<8x1xf32>
    %112 = tpu.reciprocal %111 {approx = true} : vector<8x1xf32> -> vector<8x1xf32>
    %113 = arith.truncf %109 : vector<8x8xf32> to vector<8x8xbf16>
    %c3_66 = arith.constant 3 : index
    %c0_67 = arith.constant 0 : index
    %c0_68 = arith.constant 0 : index
    %114 = vector.load %arg16[%c3_66, %c0_67, %c0_68] : memref<4x8x8xbf16, #tpu.memory_space<vmem>>, vector<1x8x8xbf16>
    %115 = vector.shape_cast %114 : vector<1x8x8xbf16> to vector<8x8xbf16>
    %cst_69 = arith.constant dense<0.000000e+00> : vector<8x8xf32>
    %116 = tpu.matmul %113, %115, %cst_69 {dimension_numbers = #tpu.dot_dimension_numbers<[1], [0], [0], [1], [0, 0, 1, 1], [], []>} : vector<8x8xbf16>, vector<8x8xbf16>, vector<8x8xf32> -> vector<8x8xf32>
    %117 = vector.broadcast %112 : vector<8x1xf32> to vector<8x8xf32>
    %118 = arith.mulf %116, %117 : vector<8x8xf32>
    %119 = arith.truncf %118 : vector<8x8xf32> to vector<8x8xbf16>
    %120 = tpu.concatenate %35, %63, %91, %119 in 1 : vector<8x8xbf16>, vector<8x8xbf16>, vector<8x8xbf16>, vector<8x8xbf16> -> vector<8x32xbf16>
    %c0_70 = arith.constant 0 : index
    %c0_71 = arith.constant 0 : index
    %121 = vector.load %arg10[%c0_70, %c0_71] : memref<32x32xbf16, #tpu.memory_space<vmem>>, vector<32x32xbf16>
    %cst_72 = arith.constant dense<0.000000e+00> : vector<8x32xf32>
    %122 = tpu.matmul %120, %121, %cst_72 {dimension_numbers = #tpu.dot_dimension_numbers<[1], [0], [0], [1], [0, 0, 1, 1], [], []>} : vector<8x32xbf16>, vector<32x32xbf16>, vector<8x32xf32> -> vector<8x32xf32>
    %c0_73 = arith.constant 0 : index
    %c0_74 = arith.constant 0 : index
    %123 = vector.load %arg11[%c0_73, %c0_74] : memref<1x32xf32, #tpu.memory_space<vmem>>, vector<1x32xf32>
    %124 = vector.broadcast %123 : vector<1x32xf32> to vector<8x32xf32>
    %125 = arith.addf %122, %124 : vector<8x32xf32>
    %126 = arith.addf %4, %125 : vector<8x32xf32>
    %cst_75 = arith.constant dense<0.000000e+00> : vector<8xf32>
    %127 = vector.multi_reduction <add>, %126, %cst_75 [1] : vector<8x32xf32> to vector<8xf32>
    %128 = vector.shape_cast %127 : vector<8xf32> to vector<8x1xf32>
    %cst_76 = arith.constant 3.200000e+01 : f32
    %129 = vector.broadcast %cst_76 : f32 to vector<8x1xf32>
    %130 = arith.divf %128, %129 : vector<8x1xf32>
    %131 = vector.broadcast %130 : vector<8x1xf32> to vector<8x32xf32>
    %132 = arith.subf %126, %131 : vector<8x32xf32>
    %133 = vector.broadcast %130 : vector<8x1xf32> to vector<8x32xf32>
    %134 = arith.subf %126, %133 : vector<8x32xf32>
    %135 = arith.mulf %132, %134 : vector<8x32xf32>
    %cst_77 = arith.constant dense<0.000000e+00> : vector<8xf32>
    %136 = vector.multi_reduction <add>, %135, %cst_77 [1] : vector<8x32xf32> to vector<8xf32>
    %137 = vector.shape_cast %136 : vector<8xf32> to vector<8x1xf32>
    %cst_78 = arith.constant 3.200000e+01 : f32
    %138 = vector.broadcast %cst_78 : f32 to vector<8x1xf32>
    %139 = arith.divf %137, %138 : vector<8x1xf32>
    %140 = vector.broadcast %130 : vector<8x1xf32> to vector<8x32xf32>
    %141 = arith.subf %126, %140 : vector<8x32xf32>
    %cst_79 = arith.constant 9.99999996E-13 : f32
    %142 = vector.broadcast %cst_79 : f32 to vector<8x1xf32>
    %143 = arith.addf %139, %142 : vector<8x1xf32>
    %144 = math.rsqrt %143 : vector<8x1xf32>
    %145 = vector.broadcast %144 : vector<8x1xf32> to vector<8x32xf32>
    %146 = arith.mulf %141, %145 : vector<8x32xf32>
    %c0_80 = arith.constant 0 : index
    %c0_81 = arith.constant 0 : index
    %147 = vector.load %arg12[%c0_80, %c0_81] : memref<1x32xf32, #tpu.memory_space<vmem>>, vector<1x32xf32>
    %148 = vector.broadcast %147 : vector<1x32xf32> to vector<8x32xf32>
    %149 = arith.mulf %146, %148 : vector<8x32xf32>
    %c0_82 = arith.constant 0 : index
    %c0_83 = arith.constant 0 : index
    %150 = vector.load %arg13[%c0_82, %c0_83] : memref<1x32xf32, #tpu.memory_space<vmem>>, vector<1x32xf32>
    %151 = vector.broadcast %150 : vector<1x32xf32> to vector<8x32xf32>
    %152 = arith.addf %149, %151 : vector<8x32xf32>
    %c0_84 = arith.constant 0 : index
    %c0_85 = arith.constant 0 : index
    %c0_86 = arith.constant 0 : index
    %153 = vector.load %arg14[%c0_84, %c0_85, %c0_86] : memref<1x8x32xf32, #tpu.memory_space<vmem>>, vector<1x8x32xf32>
    %154 = vector.shape_cast %153 : vector<1x8x32xf32> to vector<8x32xf32>
    %155 = vector.shape_cast %152 : vector<8x32xf32> to vector<1x8x32xf32>
    tpu.vector_store %arg14[%c0_84, %c0_85, %c0_86], %155 {strides = array<i32>} : memref<1x8x32xf32, #tpu.memory_space<vmem>>, vector<1x8x32xf32>,
    return
  }
  func.func @transform_0(%arg0: i32, %arg1: i32) -> (i32, i32, i32) {
    %c0_i32 = arith.constant 0 : i32
    %c0_i32_0 = arith.constant 0 : i32
    %c0_i32_1 = arith.constant 0 : i32
    return %arg0, %c0_i32, %c0_i32_0 : i32, i32, i32
  }
  func.func @transform_1(%arg0: i32, %arg1: i32) -> (i32, i32, i32) {
    %c0_i32 = arith.constant 0 : i32
    %c0_i32_0 = arith.constant 0 : i32
    %c0_i32_1 = arith.constant 0 : i32
    return %arg0, %c0_i32, %c0_i32_0 : i32, i32, i32
  }
  func.func @transform_2(%arg0: i32, %arg1: i32) -> (i32, i32, i32) {
    %c0_i32 = arith.constant 0 : i32
    %c0_i32_0 = arith.constant 0 : i32
    %c0_i32_1 = arith.constant 0 : i32
    %c0_i32_2 = arith.constant 0 : i32
    return %c0_i32, %c0_i32_0, %c0_i32_1 : i32, i32, i32
  }
  func.func @transform_3(%arg0: i32, %arg1: i32) -> (i32, i32, i32) {
    %c0_i32 = arith.constant 0 : i32
    %c0_i32_0 = arith.constant 0 : i32
    %c0_i32_1 = arith.constant 0 : i32
    %c0_i32_2 = arith.constant 0 : i32
    return %c0_i32, %c0_i32_0, %c0_i32_1 : i32, i32, i32
  }
  func.func @transform_4(%arg0: i32, %arg1: i32) -> (i32, i32, i32) {
    %c0_i32 = arith.constant 0 : i32
    %c0_i32_0 = arith.constant 0 : i32
    %c0_i32_1 = arith.constant 0 : i32
    %c0_i32_2 = arith.constant 0 : i32
    return %c0_i32, %c0_i32_0, %c0_i32_1 : i32, i32, i32
  }
  func.func @transform_5(%arg0: i32, %arg1: i32) -> (i32, i32, i32) {
    %c0_i32 = arith.constant 0 : i32
    %c0_i32_0 = arith.constant 0 : i32
    %c0_i32_1 = arith.constant 0 : i32
    %c0_i32_2 = arith.constant 0 : i32
    return %c0_i32, %c0_i32_0, %c0_i32_1 : i32, i32, i32
  }
  func.func @transform_6(%arg0: i32, %arg1: i32) -> (i32, i32, i32) {
    %c0_i32 = arith.constant 0 : i32
    %c0_i32_0 = arith.constant 0 : i32
    %c0_i32_1 = arith.constant 0 : i32
    %c0_i32_2 = arith.constant 0 : i32
    return %c0_i32, %c0_i32_0, %c0_i32_1 : i32, i32, i32
  }
  func.func @transform_7(%arg0: i32, %arg1: i32) -> (i32, i32, i32) {
    %c0_i32 = arith.constant 0 : i32
    %c0_i32_0 = arith.constant 0 : i32
    %c0_i32_1 = arith.constant 0 : i32
    %c0_i32_2 = arith.constant 0 : i32
    return %c0_i32, %c0_i32_0, %c0_i32_1 : i32, i32, i32
  }
  func.func @transform_8(%arg0: i32, %arg1: i32) -> (i32, i32) {
    %c0_i32 = arith.constant 0 : i32
    %c0_i32_0 = arith.constant 0 : i32
    %c0_i32_1 = arith.constant 0 : i32
    return %c0_i32, %c0_i32_0 : i32, i32
  }
  func.func @transform_9(%arg0: i32, %arg1: i32) -> (i32, i32) {
    %c0_i32 = arith.constant 0 : i32
    %c0_i32_0 = arith.constant 0 : i32
    %c0_i32_1 = arith.constant 0 : i32
    return %c0_i32, %c0_i32_0 : i32, i32
  }
  func.func @transform_10(%arg0: i32, %arg1: i32) -> (i32, i32) {
    %c0_i32 = arith.constant 0 : i32
    %c0_i32_0 = arith.constant 0 : i32
    %c0_i32_1 = arith.constant 0 : i32
    return %c0_i32, %c0_i32_0 : i32, i32
  }
  func.func @transform_11(%arg0: i32, %arg1: i32) -> (i32, i32) {
    %c0_i32 = arith.constant 0 : i32
    %c0_i32_0 = arith.constant 0 : i32
    %c0_i32_1 = arith.constant 0 : i32
    return %c0_i32, %c0_i32_0 : i32, i32
  }
  func.func @transform_12(%arg0: i32, %arg1: i32) -> (i32, i32, i32) {
    %c0_i32 = arith.constant 0 : i32
    %c0_i32_0 = arith.constant 0 : i32
    return %arg0, %arg1, %c0_i32 : i32, i32, i32
  }
}

</mosaic_0001>

<llo_original>
// kernel: tpu_custom_call.1
$region0: #{tpu_custom_call.1}
  #allocation0 [shape = 'u32[]', space=smem, size = 0x4, offset = 0x4, fixed_abs, tag = 'smem constant byte address 0x4 - core index']
  #allocation1 [shape = 'u32[144,128]{1,0:T(1,128)}', space=vmem, size = 0x12000, scoped, tag = 'internal scratch']
  #allocation2 [shape = 'bf16[4,8,8]{2,1,0:T(8,128)(2,1)}', space=vmem, size = 0x2000, scoped, tag = 'scratch operand']
  #allocation3 [shape = 'bf16[4,8,8]{2,1,0:T(8,128)(2,1)}', space=vmem, size = 0x2000, scoped, tag = 'scratch operand']
  %s0 = inlined_call_operand.vmem [shape: f32[2,8,32], index: 0, kind: input, shape index: {}]
  %s1 = inlined_call_operand.vmem [shape: f32[2,1,8], index: 1, kind: input, shape index: {}]
  %s2 = inlined_call_operand.vmem [shape: bf16[4,32,8], index: 2, kind: input, shape index: {}]
  %s3 = inlined_call_operand.vmem [shape: f32[4,1,8], index: 3, kind: input, shape index: {}]
  %s4 = inlined_call_operand.vmem [shape: bf16[4,32,8], index: 4, kind: input, shape index: {}]
  %s5 = inlined_call_operand.vmem [shape: f32[4,1,8], index: 5, kind: input, shape index: {}]
  %s6 = inlined_call_operand.vmem [shape: bf16[4,32,8], index: 6, kind: input, shape index: {}]
  %s7 = inlined_call_operand.vmem [shape: f32[4,1,8], index: 7, kind: input, shape index: {}]
  %s8 = inlined_call_operand.vmem [shape: bf16[32,32], index: 8, kind: input, shape index: {}]
  %s9 = inlined_call_operand.vmem [shape: f32[1,32], index: 9, kind: input, shape index: {}]
  %s10 = inlined_call_operand.vmem [shape: f32[1,32], index: 10, kind: input, shape index: {}]
  %s11 = inlined_call_operand.vmem [shape: f32[1,32], index: 11, kind: input, shape index: {}]
  %s12 = inlined_call_operand.hbm [shape: f32[2,8,32], index: 12, kind: output, shape index: {}]
  %s13 = sld [smem:[#allocation0]]
  $region85: #{tpu_custom_call.1} parent=0
    _
  %s15 = ssub.s32 1, %s13
  %s16 = scalar_select 0, %s15, %s13
  $region1: #{tpu_custom_call.1} parent=0
    #allocation4 [shape = 'u8[8192]{0}', space=vmem, size = 0x2000, scoped, tag = 'output window, operand 0']
    #allocation5 [shape = 's32[2]{0}', space=sflag, size = 0x8, scoped, tag = 'scoped memory for tpu_custom_call.1']
    %17 = vsyncpa [#allocation5], 0
    %s18 = scalar_lea.sflag [#allocation5], 1
    %19 = vsyncpa %s18, 0
    loop: start=0, step=1, limit=4
    $region2: #{tpu_custom_call.1} parent=1 // loop_pre_header
      _
    $region3: #{tpu_custom_call.1} parent=1 // loop_header
      %s21 = sphi 0, %s25
      %p22 = scmp.ge.s32.totalorder %s21, 4
      %s28 = sphi 0, %s40
      %s29 = sphi 0, %s36
      %s30 = sphi 0, %s28
      %s31 = sphi 0, %s29
      %s32 = sphi 0, %s30
      %s33 = sphi 0, %s31
      %s43 = sphi 0, %s45
      %s46 = sphi 0, %s43
      %s47 = sphi 0, %s46
      %s63 = sphi 0, %s47
      %s69 = sphi 0, %s71
      %s72 = sphi 0, %s69
      %s73 = sphi 0, %s72
      %s89 = sphi 0, %s73
      %s93 = sphi 0, %s93
      %s95 = sphi 0, %s93
      %s96 = sphi 0, %s95
      %s110 = sphi 0, %s96
      %s114 = sphi 0, %s114
      %s116 = sphi 0, %s114
      %s117 = sphi 0, %s116
      %s131 = sphi 0, %s117
      %s135 = sphi 0, %s135
      %s137 = sphi 0, %s135
      %s138 = sphi 0, %s137
      %s152 = sphi 0, %s138
      %s156 = sphi 0, %s156
      %s158 = sphi 0, %s156
      %s159 = sphi 0, %s158
      %s173 = sphi 0, %s159
      %s177 = sphi 0, %s177
      %s179 = sphi 0, %s177
      %s180 = sphi 0, %s179
      %s194 = sphi 0, %s180
      %s198 = sphi 0, %s198
      %s200 = sphi 0, %s198
      %s201 = sphi 0, %s200
      %s215 = sphi 0, %s201
      %s219 = sphi 0, %s219
      %s221 = sphi 0, %s219
      %s222 = sphi 0, %s221
      %s236 = sphi 0, %s222
      %s240 = sphi 0, %s240
      %s242 = sphi 0, %s240
      %s243 = sphi 0, %s242
      %s257 = sphi 0, %s243
      %s261 = sphi 0, %s261
      %s263 = sphi 0, %s261
      %s264 = sphi 0, %s263
      %s278 = sphi 0, %s264
      %s282 = sphi 0, %s282
      %s284 = sphi 0, %s282
      %s285 = sphi 0, %s284
      %s299 = sphi 0, %s285
      %s307 = sphi 0, %s309
      %s310 = sphi 0, %s307
      %s311 = sphi 0, %s310
      %s327 = sphi 0, %s311
    $region4: #{tpu_custom_call.1} parent=1 // loop_header_branch
      %24 = sbr.rel (%p22) target = $region8
    $region5: #{tpu_custom_call.1} parent=1 // loop_body
      %s26 = ssub.s32 %s21, 1
      %s27 = ssub.s32 %s21, 2
      %s34 = sadd.s32 1, %s29
      %p35 = scmp.ge.s32.totalorder %s34, 1
      %s36 = scalar_select %p35, 0, %s34
      %s37 = sadd.s32 1, %s28
      %s38 = scalar_select %p35, %s37, %s28
      %p39 = scmp.ge.s32.totalorder %s38, 2
      %s40 = scalar_select %p39, 0, %s38
      %s41 = ssub.s32 %s28, %s40
      %p42 = scmp.eq.s32.totalorder %s41, 0
      %s44 = sadd.s32 %s43, 1
      %s45 = scalar_select %p42, %s43, %s44
      %p48 = pneg %p42
      %p49 = scmp.eq.s32.totalorder %s21, 1
      %p50 = por %p48, %p49
      %p51 = scmp.ne.s32.totalorder %s43, %s46
      %p52 = scmp.eq.s32.totalorder %s21, 0
      %p53 = por %p51, %p52
      %p54 = scmp.ne.s32.totalorder %s43, %s46
      %p55 = scmp.eq.s32.totalorder %s26, 1
      %p56 = por %p54, %p55
      %p57 = scmp.ne.s32.totalorder %s46, %s47
      %p58 = scmp.eq.s32.totalorder %s26, 0
      %p59 = por %p57, %p58
      %p60 = scmp.ne.s32.totalorder %s46, %s47
      %p61 = scmp.eq.s32.totalorder %s27, 1
      %p62 = por %p60, %p61
      %p64 = scmp.ne.s32.totalorder %s47, %s63
      %p65 = scmp.eq.s32.totalorder %s27, 0
      %p66 = por %p64, %p65
      %s67 = ssub.s32 %s28, %s40
      %p68 = scmp.eq.s32.totalorder %s67, 0
      %s70 = sadd.s32 %s69, 1
      %s71 = scalar_select %p68, %s69, %s70
      %p74 = pneg %p68
      %p75 = scmp.eq.s32.totalorder %s21, 1
      %p76 = por %p74, %p75
      %p77 = scmp.ne.s32.totalorder %s69, %s72
      %p78 = scmp.eq.s32.totalorder %s21, 0
      %p79 = por %p77, %p78
      %p80 = scmp.ne.s32.totalorder %s69, %s72
      %p81 = scmp.eq.s32.totalorder %s26, 1
      %p82 = por %p80, %p81
      %p83 = scmp.ne.s32.totalorder %s72, %s73
      %p84 = scmp.eq.s32.totalorder %s26, 0
      %p85 = por %p83, %p84
      %p86 = scmp.ne.s32.totalorder %s72, %s73
      %p87 = scmp.eq.s32.totalorder %s27, 1
      %p88 = por %p86, %p87
      %p90 = scmp.ne.s32.totalorder %s73, %s89
      %p91 = scmp.eq.s32.totalorder %s27, 0
      %p92 = por %p90, %p91
      %s94 = sadd.s32 %s93, 1
      %p97 = scmp.eq.s32.totalorder %s21, 1
      %p98 = scmp.ne.s32.totalorder %s93, %s95
      %p99 = scmp.eq.s32.totalorder %s21, 0
      %p100 = por %p98, %p99
      %p101 = scmp.ne.s32.totalorder %s93, %s95
      %p102 = scmp.eq.s32.totalorder %s26, 1
      %p103 = por %p101, %p102
      %p104 = scmp.ne.s32.totalorder %s95, %s96
      %p105 = scmp.eq.s32.totalorder %s26, 0
      %p106 = por %p104, %p105
      %p107 = scmp.ne.s32.totalorder %s95, %s96
      %p108 = scmp.eq.s32.totalorder %s27, 1
      %p109 = por %p107, %p108
      %p111 = scmp.ne.s32.totalorder %s96, %s110
      %p112 = scmp.eq.s32.totalorder %s27, 0
      %p113 = por %p111, %p112
      %s115 = sadd.s32 %s114, 1
      %p118 = scmp.eq.s32.totalorder %s21, 1
      %p119 = scmp.ne.s32.totalorder %s114, %s116
      %p120 = scmp.eq.s32.totalorder %s21, 0
      %p121 = por %p119, %p120
      %p122 = scmp.ne.s32.totalorder %s114, %s116
      %p123 = scmp.eq.s32.totalorder %s26, 1
      %p124 = por %p122, %p123
      %p125 = scmp.ne.s32.totalorder %s116, %s117
      %p126 = scmp.eq.s32.totalorder %s26, 0
      %p127 = por %p125, %p126
      %p128 = scmp.ne.s32.totalorder %s116, %s117
      %p129 = scmp.eq.s32.totalorder %s27, 1
      %p130 = por %p128, %p129
      %p132 = scmp.ne.s32.totalorder %s117, %s131
      %p133 = scmp.eq.s32.totalorder %s27, 0
      %p134 = por %p132, %p133
      %s136 = sadd.s32 %s135, 1
      %p139 = scmp.eq.s32.totalorder %s21, 1
      %p140 = scmp.ne.s32.totalorder %s135, %s137
      %p141 = scmp.eq.s32.totalorder %s21, 0
      %p142 = por %p140, %p141
      %p143 = scmp.ne.s32.totalorder %s135, %s137
      %p144 = scmp.eq.s32.totalorder %s26, 1
      %p145 = por %p143, %p144
      %p146 = scmp.ne.s32.totalorder %s137, %s138
      %p147 = scmp.eq.s32.totalorder %s26, 0
      %p148 = por %p146, %p147
      %p149 = scmp.ne.s32.totalorder %s137, %s138
      %p150 = scmp.eq.s32.totalorder %s27, 1
      %p151 = por %p149, %p150
      %p153 = scmp.ne.s32.totalorder %s138, %s152
      %p154 = scmp.eq.s32.totalorder %s27, 0
      %p155 = por %p153, %p154
      %s157 = sadd.s32 %s156, 1
      %p160 = scmp.eq.s32.totalorder %s21, 1
      %p161 = scmp.ne.s32.totalorder %s156, %s158
      %p162 = scmp.eq.s32.totalorder %s21, 0
      %p163 = por %p161, %p162
      %p164 = scmp.ne.s32.totalorder %s156, %s158
      %p165 = scmp.eq.s32.totalorder %s26, 1
      %p166 = por %p164, %p165
      %p167 = scmp.ne.s32.totalorder %s158, %s159
      %p168 = scmp.eq.s32.totalorder %s26, 0
      %p169 = por %p167, %p168
      %p170 = scmp.ne.s32.totalorder %s158, %s159
      %p171 = scmp.eq.s32.totalorder %s27, 1
      %p172 = por %p170, %p171
      %p174 = scmp.ne.s32.totalorder %s159, %s173
      %p175 = scmp.eq.s32.totalorder %s27, 0
      %p176 = por %p174, %p175
      %s178 = sadd.s32 %s177, 1
      %p181 = scmp.eq.s32.totalorder %s21, 1
      %p182 = scmp.ne.s32.totalorder %s177, %s179
      %p183 = scmp.eq.s32.totalorder %s21, 0
      %p184 = por %p182, %p183
      %p185 = scmp.ne.s32.totalorder %s177, %s179
      %p186 = scmp.eq.s32.totalorder %s26, 1
      %p187 = por %p185, %p186
      %p188 = scmp.ne.s32.totalorder %s179, %s180
      %p189 = scmp.eq.s32.totalorder %s26, 0
      %p190 = por %p188, %p189
      %p191 = scmp.ne.s32.totalorder %s179, %s180
      %p192 = scmp.eq.s32.totalorder %s27, 1
      %p193 = por %p191, %p192
      %p195 = scmp.ne.s32.totalorder %s180, %s194
      %p196 = scmp.eq.s32.totalorder %s27, 0
      %p197 = por %p195, %p196
      %s199 = sadd.s32 %s198, 1
      %p202 = scmp.eq.s32.totalorder %s21, 1
      %p203 = scmp.ne.s32.totalorder %s198, %s200
      %p204 = scmp.eq.s32.totalorder %s21, 0
      %p205 = por %p203, %p204
      %p206 = scmp.ne.s32.totalorder %s198, %s200
      %p207 = scmp.eq.s32.totalorder %s26, 1
      %p208 = por %p206, %p207
      %p209 = scmp.ne.s32.totalorder %s200, %s201
      %p210 = scmp.eq.s32.totalorder %s26, 0
      %p211 = por %p209, %p210
      %p212 = scmp.ne.s32.totalorder %s200, %s201
      %p213 = scmp.eq.s32.totalorder %s27, 1
      %p214 = por %p212, %p213
      %p216 = scmp.ne.s32.totalorder %s201, %s215
      %p217 = scmp.eq.s32.totalorder %s27, 0
      %p218 = por %p216, %p217
      %s220 = sadd.s32 %s219, 1
      %p223 = scmp.eq.s32.totalorder %s21, 1
      %p224 = scmp.ne.s32.totalorder %s219, %s221
      %p225 = scmp.eq.s32.totalorder %s21, 0
      %p226 = por %p224, %p225
      %p227 = scmp.ne.s32.totalorder %s219, %s221
      %p228 = scmp.eq.s32.totalorder %s26, 1
      %p229 = por %p227, %p228
      %p230 = scmp.ne.s32.totalorder %s221, %s222
      %p231 = scmp.eq.s32.totalorder %s26, 0
      %p232 = por %p230, %p231
      %p233 = scmp.ne.s32.totalorder %s221, %s222
      %p234 = scmp.eq.s32.totalorder %s27, 1
      %p235 = por %p233, %p234
      %p237 = scmp.ne.s32.totalorder %s222, %s236
      %p238 = scmp.eq.s32.totalorder %s27, 0
      %p239 = por %p237, %p238
      %s241 = sadd.s32 %s240, 1
      %p244 = scmp.eq.s32.totalorder %s21, 1
      %p245 = scmp.ne.s32.totalorder %s240, %s242
      %p246 = scmp.eq.s32.totalorder %s21, 0
      %p247 = por %p245, %p246
      %p248 = scmp.ne.s32.totalorder %s240, %s242
      %p249 = scmp.eq.s32.totalorder %s26, 1
      %p250 = por %p248, %p249
      %p251 = scmp.ne.s32.totalorder %s242, %s243
      %p252 = scmp.eq.s32.totalorder %s26, 0
      %p253 = por %p251, %p252
      %p254 = scmp.ne.s32.totalorder %s242, %s243
      %p255 = scmp.eq.s32.totalorder %s27, 1
      %p256 = por %p254, %p255
      %p258 = scmp.ne.s32.totalorder %s243, %s257
      %p259 = scmp.eq.s32.totalorder %s27, 0
      %p260 = por %p258, %p259
      %s262 = sadd.s32 %s261, 1
      %p265 = scmp.eq.s32.totalorder %s21, 1
      %p266 = scmp.ne.s32.totalorder %s261, %s263
      %p267 = scmp.eq.s32.totalorder %s21, 0
      %p268 = por %p266, %p267
      %p269 = scmp.ne.s32.totalorder %s261, %s263
      %p270 = scmp.eq.s32.totalorder %s26, 1
      %p271 = por %p269, %p270
      %p272 = scmp.ne.s32.totalorder %s263, %s264
      %p273 = scmp.eq.s32.totalorder %s26, 0
      %p274 = por %p272, %p273
      %p275 = scmp.ne.s32.totalorder %s263, %s264
      %p276 = scmp.eq.s32.totalorder %s27, 1
      %p277 = por %p275, %p276
      %p279 = scmp.ne.s32.totalorder %s264, %s278
      %p280 = scmp.eq.s32.totalorder %s27, 0
      %p281 = por %p279, %p280
      %s283 = sadd.s32 %s282, 1
      %p286 = scmp.eq.s32.totalorder %s21, 1
      %p287 = scmp.ne.s32.totalorder %s282, %s284
      %p288 = scmp.eq.s32.totalorder %s21, 0
      %p289 = por %p287, %p288
      %p290 = scmp.ne.s32.totalorder %s282, %s284
      %p291 = scmp.eq.s32.totalorder %s26, 1
      %p292 = por %p290, %p291
      %p293 = scmp.ne.s32.totalorder %s284, %s285
      %p294 = scmp.eq.s32.totalorder %s26, 0
      %p295 = por %p293, %p294
      %p296 = scmp.ne.s32.totalorder %s284, %s285
      %p297 = scmp.eq.s32.totalorder %s27, 1
      %p298 = por %p296, %p297
      %p300 = scmp.ne.s32.totalorder %s285, %s299
      %p301 = scmp.eq.s32.totalorder %s27, 0
      %p302 = por %p300, %p301
      %s303 = ssub.s32 %s28, %s40
      %s304 = ssub.s32 %s29, %s36
      %s305 = sor.u32 %s303, %s304
      %p306 = scmp.eq.s32.totalorder %s305, 0
      %s308 = sadd.s32 %s307, 1
      %s309 = scalar_select %p306, %s307, %s308
      %p312 = pneg %p306
      %p313 = scmp.eq.s32.totalorder %s21, 1
      %p314 = por %p312, %p313
      %p315 = scmp.ne.s32.totalorder %s307, %s310
      %p316 = scmp.eq.s32.totalorder %s21, 0
      %p317 = por %p315, %p316
      %p318 = scmp.ne.s32.totalorder %s307, %s310
      %p319 = scmp.eq.s32.totalorder %s26, 1
      %p320 = por %p318, %p319
      %p321 = scmp.ne.s32.totalorder %s310, %s311
      %p322 = scmp.eq.s32.totalorder %s26, 0
      %p323 = por %p321, %p322
      %p324 = scmp.ne.s32.totalorder %s310, %s311
      %p325 = scmp.eq.s32.totalorder %s27, 1
      %p326 = por %p324, %p325
      %p328 = scmp.ne.s32.totalorder %s311, %s327
      %p329 = scmp.eq.s32.totalorder %s27, 0
      %p330 = por %p328, %p329
      %p331 = scmp.le.s32.totalorder 1, %s21
      %p332 = scmp.lt.s32.totalorder %s21, 3
      %p333 = pnand %p331, %p332
      %p334 = pneg %p333
      // Predicated region
      $region9: #{tpu_custom_call.1} parent=5 // pred_check
        _
      $region10: #{tpu_custom_call.1} parent=5 // pred_check_branch
        %336 = sbr.rel (%p333) target = $region12
      $region11: #{tpu_custom_call.1} parent=5 // pred_region
        %s337 = ssub.s32 %s21, 1
        // Predicated region
        $region13: #{tpu_custom_call.1} parent=11 // pred_check
          %p338 = pneg %p106
        $region14: #{tpu_custom_call.1} parent=11 // pred_check_branch
          %340 = sbr.rel (%p338) target = $region16
        $region15: #{tpu_custom_call.1} parent=11 // pred_region
          _
        $region16: #{tpu_custom_call.1} parent=11 // pred_fallthru
          _
        // Predicated region
        $region17: #{tpu_custom_call.1} parent=11 // pred_check
          %p341 = pneg %p127
        $region18: #{tpu_custom_call.1} parent=11 // pred_check_branch
          %343 = sbr.rel (%p341) target = $region20
        $region19: #{tpu_custom_call.1} parent=11 // pred_region
          _
        $region20: #{tpu_custom_call.1} parent=11 // pred_fallthru
          _
        // Predicated region
        $region21: #{tpu_custom_call.1} parent=11 // pred_check
          %p344 = pneg %p148
        $region22: #{tpu_custom_call.1} parent=11 // pred_check_branch
          %346 = sbr.rel (%p344) target = $region24
        $region23: #{tpu_custom_call.1} parent=11 // pred_region
          _
        $region24: #{tpu_custom_call.1} parent=11 // pred_fallthru
          _
        // Predicated region
        $region25: #{tpu_custom_call.1} parent=11 // pred_check
          %p347 = pneg %p169
        $region26: #{tpu_custom_call.1} parent=11 // pred_check_branch
          %349 = sbr.rel (%p347) target = $region28
        $region27: #{tpu_custom_call.1} parent=11 // pred_region
          _
        $region28: #{tpu_custom_call.1} parent=11 // pred_fallthru
          _
        // Predicated region
        $region29: #{tpu_custom_call.1} parent=11 // pred_check
          %p350 = pneg %p190
        $region30: #{tpu_custom_call.1} parent=11 // pred_check_branch
          %352 = sbr.rel (%p350) target = $region32
        $region31: #{tpu_custom_call.1} parent=11 // pred_region
          _
        $region32: #{tpu_custom_call.1} parent=11 // pred_fallthru
          _
        // Predicated region
        $region33: #{tpu_custom_call.1} parent=11 // pred_check
          %p353 = pneg %p211
        $region34: #{tpu_custom_call.1} parent=11 // pred_check_branch
          %355 = sbr.rel (%p353) target = $region36
        $region35: #{tpu_custom_call.1} parent=11 // pred_region
          _
        $region36: #{tpu_custom_call.1} parent=11 // pred_fallthru
          _
        // Predicated region
        $region37: #{tpu_custom_call.1} parent=11 // pred_check
          %p356 = pneg %p232
        $region38: #{tpu_custom_call.1} parent=11 // pred_check_branch
          %358 = sbr.rel (%p356) target = $region40
        $region39: #{tpu_custom_call.1} parent=11 // pred_region
          _
        $region40: #{tpu_custom_call.1} parent=11 // pred_fallthru
          _
        // Predicated region
        $region41: #{tpu_custom_call.1} parent=11 // pred_check
          %p359 = pneg %p253
        $region42: #{tpu_custom_call.1} parent=11 // pred_check_branch
          %361 = sbr.rel (%p359) target = $region44
        $region43: #{tpu_custom_call.1} parent=11 // pred_region
          _
        $region44: #{tpu_custom_call.1} parent=11 // pred_fallthru
          _
        // Predicated region
        $region45: #{tpu_custom_call.1} parent=11 // pred_check
          %p362 = pneg %p274
        $region46: #{tpu_custom_call.1} parent=11 // pred_check_branch
          %364 = sbr.rel (%p362) target = $region48
        $region47: #{tpu_custom_call.1} parent=11 // pred_region
          _
        $region48: #{tpu_custom_call.1} parent=11 // pred_fallthru
          _
        // Predicated region
        $region49: #{tpu_custom_call.1} parent=11 // pred_check
          %p365 = pneg %p295
        $region50: #{tpu_custom_call.1} parent=11 // pred_check_branch
          %367 = sbr.rel (%p365) target = $region52
        $region51: #{tpu_custom_call.1} parent=11 // pred_region
          _
        $region52: #{tpu_custom_call.1} parent=11 // pred_fallthru
          _
      $region12: #{tpu_custom_call.1} parent=5 // pred_fallthru
        _
      %p368 = scmp.lt.s32.totalorder %s21, 2
      // Predicated region
      $region53: #{tpu_custom_call.1} parent=5 // pred_check
        %p369 = pneg %p368
      $region54: #{tpu_custom_call.1} parent=5 // pred_check_branch
        %371 = sbr.rel (%p369) target = $region56
      $region55: #{tpu_custom_call.1} parent=5 // pred_region
        // Predicated region
        $region57: #{tpu_custom_call.1} parent=55 // pred_check
          %p372 = pneg %p53
        $region58: #{tpu_custom_call.1} parent=55 // pred_check_branch
          %374 = sbr.rel (%p372) target = $region60
        $region59: #{tpu_custom_call.1} parent=55 // pred_region
          %p375 = scmp.lt.s32.totalorder %s28, 1
          %s376 = scalar_select %p375, %s28, 1
          %s377 = smul.addr %s376, 8
          %s378 = scalar_lea.vmem %s0, %s377
        $region60: #{tpu_custom_call.1} parent=55 // pred_fallthru
          _
        // Predicated region
        $region61: #{tpu_custom_call.1} parent=55 // pred_check
          %p379 = pneg %p79
        $region62: #{tpu_custom_call.1} parent=55 // pred_check_branch
          %381 = sbr.rel (%p379) target = $region64
        $region63: #{tpu_custom_call.1} parent=55 // pred_region
          %p382 = scmp.lt.s32.totalorder %s28, 1
          %s383 = scalar_select %p382, %s28, 1
          %s384 = scalar_lea.vmem %s1, %s383
        $region64: #{tpu_custom_call.1} parent=55 // pred_fallthru
          _
      $region56: #{tpu_custom_call.1} parent=5 // pred_fallthru
        _
      %p385 = scmp.le.s32.totalorder 1, %s21
      %p386 = scmp.lt.s32.totalorder %s21, 3
      %p387 = pnand %p385, %p386
      %p388 = pneg %p387
      // Predicated region
      $region65: #{tpu_custom_call.1} parent=5 // pred_check
        _
      $region66: #{tpu_custom_call.1} parent=5 // pred_check_branch
        %390 = sbr.rel (%p387) target = $region68
      $region67: #{tpu_custom_call.1} parent=5 // pred_region
        %s391 = ssub.s32 %s21, 1
        %p392 = scmp.lt.s32.totalorder %s30, 1
        %s393 = scalar_select %p392, %s30, 1
        %s394 = smul.addr %s393, 8
        %s395 = scalar_lea.vmem %s0, %s394
        %p396 = pneg %p59
        %p397 = pneg %p56
        %p398 = scmp.lt.s32.totalorder %s30, 1
        %s399 = scalar_select %p398, %s30, 1
        %s400 = scalar_lea.vmem %s1, %s399
        %p401 = pneg %p85
        %p402 = pneg %p82
        %p403 = pneg %p106
        %p404 = pneg %p103
        %p405 = pneg %p127
        %p406 = pneg %p124
        %p407 = pneg %p148
        %p408 = pneg %p145
        %p409 = pneg %p169
        %p410 = pneg %p166
        %p411 = pneg %p190
        %p412 = pneg %p187
        %p413 = pneg %p211
        %p414 = pneg %p208
        %p415 = pneg %p232
        %p416 = pneg %p229
        %p417 = pneg %p253
        %p418 = pneg %p250
        %p419 = pneg %p274
        %p420 = pneg %p271
        %p421 = pneg %p295
        %p422 = pneg %p292
        %p423 = pneg %p323
        %p424 = pneg %p320
        %s425 = sand.u32 %s310, 1
        %s426 = scalar_lea.sflag [#allocation5], %s425
        %s427 = sand.u32 %s310, 1
        %s428 = smul.addr %s427, 8
        %s429 = scalar_lea.vmem [#allocation4], %s428
        %p430 = scmp.lt.s32.totalorder %s30, 1
        %s431 = scalar_select %p430, %s30, 1
        %s432 = smul.addr %s431, 8
        %s433 = scalar_lea.vmem %s0, %s432
        %p434 = scmp.lt.s32.totalorder %s30, 1
        %s435 = scalar_select %p434, %s30, 1
        %s436 = scalar_lea.vmem %s1, %s435
        %p438 = scmp.eq.s32.totalorder %s31, 0
        // Predicated region
        $region69: #{tpu_custom_call.1} parent=67 // pred_check
          %p439 = pneg %p438
        $region70: #{tpu_custom_call.1} parent=67 // pred_check_branch
          %441 = sbr.rel (%p439) target = $region72
        $region71: #{tpu_custom_call.1} parent=67 // pred_region
          %v442 = vld [vmem:[%s433] sm:$0xff]
          %v443 = vpack.c.bf16 %v442, %v442
          %v444 = vld [vmem:[%s4] sm:$0xf]
          %v445 = vld [vmem:[%s4 + $0x4] sm:$0xf]
          %v446 = vld [vmem:[%s4 + $0x8] sm:$0xf]
          %v447 = vld [vmem:[%s4 + $0xc] sm:$0xf]
          %v448 = vld [vmem:[%s5] sm:$0x1]
          %v450 = vlaneseq
          %v451 = vshrl.u32 %v450, 7
          %v452 = vsub.s32 0, %v451
          %v453 = vrot.slane %v448, %v452
          %v459 = vunpack.c.l.b16 %v444
          %v460 = vunpack.c.l.b16 %v445
          %v461 = vunpack.c.l.b16 %v446
          %v462 = vunpack.c.l.b16 %v447
          %v463 = vpack.c.b16 %v460, %v459
          %v464 = vpack.c.b16 %v462, %v461
          %vm467 = vcmask 261120
          %v469 = vsel %vm467, %v443, 0
          %471 = vmatprep.subr.bf16.mxu0 0
          %472 = vmatpush1.bf16.msra.mxu0 0
          %473 = vmatprep.subr.bf16.mxu0 0
          %474 = vmatpush1.bf16.msra.mxu0 0
          %475 = vmatprep.subr.bf16.mxu0 0
          %476 = vmatpush1.bf16.msra.mxu0 0
          %477 = vmatprep.subr.bf16.mxu0 0
          %478 = vmatpush1.bf16.msra.mxu0 0
          %479 = vmatprep.subr.bf16.mxu0 0
          %480 = vmatpush1.bf16.msra.mxu0 0
          %481 = vmatprep.subr.bf16.mxu0 0
          %482 = vmatpush1.bf16.msra.mxu0 0
          %483 = vmatprep.subr.bf16.mxu0 0
          %484 = vmatpush1.bf16.msra.mxu0 %v464
          %485 = vmatprep.subr.bf16.mxu0 0
          %486 = vmatpush1.bf16.msra.mxu0 %v463
          %487 = vmatprep.subr.bf16.mxu0 0
          %488 = vmatpush2.bf16.msra.mxu0 0
          %489 = vmatprep.subr.bf16.mxu0 0
          %490 = vmatpush2.bf16.msra.mxu0 0
          %491 = vmatprep.subr.bf16.mxu0 0
          %492 = vmatpush2.bf16.msra.mxu0 0
          %493 = vmatprep.subr.bf16.mxu0 0
          %494 = vmatpush2.bf16.msra.mxu0 0
          %495 = vmatprep.subr.bf16.mxu0 0
          %496 = vmatpush2.bf16.msra.mxu0 0
          %497 = vmatprep.subr.bf16.mxu0 0
          %498 = vmatpush2.bf16.msra.mxu0 0
          %499 = vmatprep.subr.bf16.mxu0 0
          %500 = vmatpush2.bf16.msra.mxu0 0
          %501 = vmatprep.subr.bf16.mxu0 0
          %502 = vmatpush2.bf16.msra.mxu0 0
          %503 = vmatprep.mubr.bf16.mxu0 0
          %504 = vmatmul.mubr.bf16.gmra.mxu0 %v469
          %v505 = vpop.f32.mrf.mxu0
          %v506 = vadd.f32 %v453, %v505
          %v507 = vpop.f32.mrf.mxu0
          %v508 = vpop.f32.mrf.mxu0
          %v509 = vpop.f32.mrf.mxu0
          %510 = vdwg.mxu0
          %v511 = vpack.c.bf16 %v506, %v506
          %vm512 = vcmask 60416
          %513 = vst.msk [vmem:[#allocation2] sm:$0xf] %vm512, %v511
          %v514 = vld [vmem:[%s6] sm:$0xf]
          %v515 = vld [vmem:[%s6 + $0x4] sm:$0xf]
          %v516 = vld [vmem:[%s6 + $0x8] sm:$0xf]
          %v517 = vld [vmem:[%s6 + $0xc] sm:$0xf]
          %v518 = vld [vmem:[%s7] sm:$0x1]
          %v520 = vlaneseq
          %v521 = vshrl.u32 %v520, 7
          %v522 = vsub.s32 0, %v521
          %v523 = vrot.slane %v518, %v522
          %v529 = vunpack.c.l.b16 %v514
          %v530 = vunpack.c.l.b16 %v515
          %v531 = vunpack.c.l.b16 %v516
          %v532 = vunpack.c.l.b16 %v517
          %v533 = vpack.c.b16 %v530, %v529
          %v534 = vpack.c.b16 %v532, %v531
          %537 = vmatprep.subr.bf16.mxu0 0
          %538 = vmatpush1.bf16.msra.mxu0 0
          %539 = vmatprep.subr.bf16.mxu0 0
          %540 = vmatpush1.bf16.msra.mxu0 0
          %541 = vmatprep.subr.bf16.mxu0 0
          %542 = vmatpush1.bf16.msra.mxu0 0
          %543 = vmatprep.subr.bf16.mxu0 0
          %544 = vmatpush1.bf16.msra.mxu0 0
          %545 = vmatprep.subr.bf16.mxu0 0
          %546 = vmatpush1.bf16.msra.mxu0 0
          %547 = vmatprep.subr.bf16.mxu0 0
          %548 = vmatpush1.bf16.msra.mxu0 0
          %549 = vmatprep.subr.bf16.mxu0 0
          %550 = vmatpush1.bf16.msra.mxu0 %v534
          %551 = vmatprep.subr.bf16.mxu0 0
          %552 = vmatpush1.bf16.msra.mxu0 %v533
          %553 = vmatprep.subr.bf16.mxu0 0
          %554 = vmatpush2.bf16.msra.mxu0 0
          %555 = vmatprep.subr.bf16.mxu0 0
          %556 = vmatpush2.bf16.msra.mxu0 0
          %557 = vmatprep.subr.bf16.mxu0 0
          %558 = vmatpush2.bf16.msra.mxu0 0
          %559 = vmatprep.subr.bf16.mxu0 0
          %560 = vmatpush2.bf16.msra.mxu0 0
          %561 = vmatprep.subr.bf16.mxu0 0
          %562 = vmatpush2.bf16.msra.mxu0 0
          %563 = vmatprep.subr.bf16.mxu0 0
          %564 = vmatpush2.bf16.msra.mxu0 0
          %565 = vmatprep.subr.bf16.mxu0 0
          %566 = vmatpush2.bf16.msra.mxu0 0
          %567 = vmatprep.subr.bf16.mxu0 0
          %568 = vmatpush2.bf16.msra.mxu0 0
          %569 = vmatprep.mubr.bf16.mxu0 0
          %570 = vmatmul.mubr.bf16.gmra.mxu0 %v469
          %v571 = vpop.f32.mrf.mxu0
          %v572 = vadd.f32 %v523, %v571
          %v573 = vpop.f32.mrf.mxu0
          %v574 = vpop.f32.mrf.mxu0
          %v575 = vpop.f32.mrf.mxu0
          %576 = vdwg.mxu0
          %v577 = vpack.c.bf16 %v572, %v572
          %578 = vst.msk [vmem:[#allocation3] sm:$0xf] %vm512, %v577
          %s579 = scalar_lea.vmem %s4, 16
          %v580 = vld [vmem:[%s579] sm:$0xf]
          %v581 = vld [vmem:[%s579 + $0x4] sm:$0xf]
          %v582 = vld [vmem:[%s579 + $0x8] sm:$0xf]
          %v583 = vld [vmem:[%s579 + $0xc] sm:$0xf]
          %s584 = scalar_lea.vmem %s5, 1
          %v585 = vld [vmem:[%s584] sm:$0x1]
          %v587 = vlaneseq
          %v588 = vshrl.u32 %v587, 7
          %v589 = vsub.s32 0, %v588
          %v590 = vrot.slane %v585, %v589
          %v596 = vunpack.c.l.b16 %v580
          %v597 = vunpack.c.l.b16 %v581
          %v598 = vunpack.c.l.b16 %v582
          %v599 = vunpack.c.l.b16 %v583
          %v600 = vpack.c.b16 %v597, %v596
          %v601 = vpack.c.b16 %v599, %v598
          %604 = vmatprep.subr.bf16.mxu0 0
          %605 = vmatpush1.bf16.msra.mxu0 0
          %606 = vmatprep.subr.bf16.mxu0 0
          %607 = vmatpush1.bf16.msra.mxu0 0
          %608 = vmatprep.subr.bf16.mxu0 0
          %609 = vmatpush1.bf16.msra.mxu0 0
          %610 = vmatprep.subr.bf16.mxu0 0
          %611 = vmatpush1.bf16.msra.mxu0 0
          %612 = vmatprep.subr.bf16.mxu0 0
          %613 = vmatpush1.bf16.msra.mxu0 0
          %614 = vmatprep.subr.bf16.mxu0 0
          %615 = vmatpush1.bf16.msra.mxu0 0
          %616 = vmatprep.subr.bf16.mxu0 0
          %617 = vmatpush1.bf16.msra.mxu0 %v601
          %618 = vmatprep.subr.bf16.mxu0 0
          %619 = vmatpush1.bf16.msra.mxu0 %v600
          %620 = vmatprep.subr.bf16.mxu0 0
          %621 = vmatpush2.bf16.msra.mxu0 0
          %622 = vmatprep.subr.bf16.mxu0 0
          %623 = vmatpush2.bf16.msra.mxu0 0
          %624 = vmatprep.subr.bf16.mxu0 0
          %625 = vmatpush2.bf16.msra.mxu0 0
          %626 = vmatprep.subr.bf16.mxu0 0
          %627 = vmatpush2.bf16.msra.mxu0 0
          %628 = vmatprep.subr.bf16.mxu0 0
          %629 = vmatpush2.bf16.msra.mxu0 0
          %630 = vmatprep.subr.bf16.mxu0 0
          %631 = vmatpush2.bf16.msra.mxu0 0
          %632 = vmatprep.subr.bf16.mxu0 0
          %633 = vmatpush2.bf16.msra.mxu0 0
          %634 = vmatprep.subr.bf16.mxu0 0
          %635 = vmatpush2.bf16.msra.mxu0 0
          %636 = vmatprep.mubr.bf16.mxu0 0
          %637 = vmatmul.mubr.bf16.gmra.mxu0 %v469
          %v638 = vpop.f32.mrf.mxu0
          %v639 = vadd.f32 %v590, %v638
          %v640 = vpop.f32.mrf.mxu0
          %v641 = vpop.f32.mrf.mxu0
          %v642 = vpop.f32.mrf.mxu0
          %643 = vdwg.mxu0
          %v644 = vpack.c.bf16 %v639, %v639
          %s645 = scalar_lea.vmem [#allocation2], 4
          %646 = vst.msk [vmem:[%s645] sm:$0xf] %vm512, %v644
          %s647 = scalar_lea.vmem %s6, 16
          %v648 = vld [vmem:[%s647] sm:$0xf]
          %v649 = vld [vmem:[%s647 + $0x4] sm:$0xf]
          %v650 = vld [vmem:[%s647 + $0x8] sm:$0xf]
          %v651 = vld [vmem:[%s647 + $0xc] sm:$0xf]
          %s652 = scalar_lea.vmem %s7, 1
          %v653 = vld [vmem:[%s652] sm:$0x1]
          %v655 = vlaneseq
          %v656 = vshrl.u32 %v655, 7
          %v657 = vsub.s32 0, %v656
          %v658 = vrot.slane %v653, %v657
          %v664 = vunpack.c.l.b16 %v648
          %v665 = vunpack.c.l.b16 %v649
          %v666 = vunpack.c.l.b16 %v650
          %v667 = vunpack.c.l.b16 %v651
          %v668 = vpack.c.b16 %v665, %v664
          %v669 = vpack.c.b16 %v667, %v666
          %672 = vmatprep.subr.bf16.mxu0 0
          %673 = vmatpush1.bf16.msra.mxu0 0
          %674 = vmatprep.subr.bf16.mxu0 0
          %675 = vmatpush1.bf16.msra.mxu0 0
          %676 = vmatprep.subr.bf16.mxu0 0
          %677 = vmatpush1.bf16.msra.mxu0 0
          %678 = vmatprep.subr.bf16.mxu0 0
          %679 = vmatpush1.bf16.msra.mxu0 0
          %680 = vmatprep.subr.bf16.mxu0 0
          %681 = vmatpush1.bf16.msra.mxu0 0
          %682 = vmatprep.subr.bf16.mxu0 0
          %683 = vmatpush1.bf16.msra.mxu0 0
          %684 = vmatprep.subr.bf16.mxu0 0
          %685 = vmatpush1.bf16.msra.mxu0 %v669
          %686 = vmatprep.subr.bf16.mxu0 0
          %687 = vmatpush1.bf16.msra.mxu0 %v668
          %688 = vmatprep.subr.bf16.mxu0 0
          %689 = vmatpush2.bf16.msra.mxu0 0
          %690 = vmatprep.subr.bf16.mxu0 0
          %691 = vmatpush2.bf16.msra.mxu0 0
          %692 = vmatprep.subr.bf16.mxu0 0
          %693 = vmatpush2.bf16.msra.mxu0 0
          %694 = vmatprep.subr.bf16.mxu0 0
          %695 = vmatpush2.bf16.msra.mxu0 0
          %696 = vmatprep.subr.bf16.mxu0 0
          %697 = vmatpush2.bf16.msra.mxu0 0
          %698 = vmatprep.subr.bf16.mxu0 0
          %699 = vmatpush2.bf16.msra.mxu0 0
          %700 = vmatprep.subr.bf16.mxu0 0
          %701 = vmatpush2.bf16.msra.mxu0 0
          %702 = vmatprep.subr.bf16.mxu0 0
          %703 = vmatpush2.bf16.msra.mxu0 0
          %704 = vmatprep.mubr.bf16.mxu0 0
          %705 = vmatmul.mubr.bf16.gmra.mxu0 %v469
          %v706 = vpop.f32.mrf.mxu0
          %v707 = vadd.f32 %v658, %v706
          %v708 = vpop.f32.mrf.mxu0
          %v709 = vpop.f32.mrf.mxu0
          %v710 = vpop.f32.mrf.mxu0
          %711 = vdwg.mxu0
          %v712 = vpack.c.bf16 %v707, %v707
          %s713 = scalar_lea.vmem [#allocation3], 4
          %714 = vst.msk [vmem:[%s713] sm:$0xf] %vm512, %v712
          %s715 = scalar_lea.vmem %s4, 32
          %v716 = vld [vmem:[%s715] sm:$0xf]
          %v717 = vld [vmem:[%s715 + $0x4] sm:$0xf]
          %v718 = vld [vmem:[%s715 + $0x8] sm:$0xf]
          %v719 = vld [vmem:[%s715 + $0xc] sm:$0xf]
          %s720 = scalar_lea.vmem %s5, 2
          %v721 = vld [vmem:[%s720] sm:$0x1]
          %v723 = vlaneseq
          %v724 = vshrl.u32 %v723, 7
          %v725 = vsub.s32 0, %v724
          %v726 = vrot.slane %v721, %v725
          %v732 = vunpack.c.l.b16 %v716
          %v733 = vunpack.c.l.b16 %v717
          %v734 = vunpack.c.l.b16 %v718
          %v735 = vunpack.c.l.b16 %v719
          %v736 = vpack.c.b16 %v733, %v732
          %v737 = vpack.c.b16 %v735, %v734
          %740 = vmatprep.subr.bf16.mxu0 0
          %741 = vmatpush1.bf16.msra.mxu0 0
          %742 = vmatprep.subr.bf16.mxu0 0
          %743 = vmatpush1.bf16.msra.mxu0 0
          %744 = vmatprep.subr.bf16.mxu0 0
          %745 = vmatpush1.bf16.msra.mxu0 0
          %746 = vmatprep.subr.bf16.mxu0 0
          %747 = vmatpush1.bf16.msra.mxu0 0
          %748 = vmatprep.subr.bf16.mxu0 0
          %749 = vmatpush1.bf16.msra.mxu0 0
          %750 = vmatprep.subr.bf16.mxu0 0
          %751 = vmatpush1.bf16.msra.mxu0 0
          %752 = vmatprep.subr.bf16.mxu0 0
          %753 = vmatpush1.bf16.msra.mxu0 %v737
          %754 = vmatprep.subr.bf16.mxu0 0
          %755 = vmatpush1.bf16.msra.mxu0 %v736
          %756 = vmatprep.subr.bf16.mxu0 0
          %757 = vmatpush2.bf16.msra.mxu0 0
          %758 = vmatprep.subr.bf16.mxu0 0
          %759 = vmatpush2.bf16.msra.mxu0 0
          %760 = vmatprep.subr.bf16.mxu0 0
          %761 = vmatpush2.bf16.msra.mxu0 0
          %762 = vmatprep.subr.bf16.mxu0 0
          %763 = vmatpush2.bf16.msra.mxu0 0
          %764 = vmatprep.subr.bf16.mxu0 0
          %765 = vmatpush2.bf16.msra.mxu0 0
          %766 = vmatprep.subr.bf16.mxu0 0
          %767 = vmatpush2.bf16.msra.mxu0 0
          %768 = vmatprep.subr.bf16.mxu0 0
          %769 = vmatpush2.bf16.msra.mxu0 0
          %770 = vmatprep.subr.bf16.mxu0 0
          %771 = vmatpush2.bf16.msra.mxu0 0
          %772 = vmatprep.mubr.bf16.mxu0 0
          %773 = vmatmul.mubr.bf16.gmra.mxu0 %v469
          %v774 = vpop.f32.mrf.mxu0
          %v775 = vadd.f32 %v726, %v774
          %v776 = vpop.f32.mrf.mxu0
          %v777 = vpop.f32.mrf.mxu0
          %v778 = vpop.f32.mrf.mxu0
          %779 = vdwg.mxu0
          %v780 = vpack.c.bf16 %v775, %v775
          %s781 = scalar_lea.vmem [#allocation2], 8
          %782 = vst.msk [vmem:[%s781] sm:$0xf] %vm512, %v780
          %s783 = scalar_lea.vmem %s6, 32
          %v784 = vld [vmem:[%s783] sm:$0xf]
          %v785 = vld [vmem:[%s783 + $0x4] sm:$0xf]
          %v786 = vld [vmem:[%s783 + $0x8] sm:$0xf]
          %v787 = vld [vmem:[%s783 + $0xc] sm:$0xf]
          %s788 = scalar_lea.vmem %s7, 2
          %v789 = vld [vmem:[%s788] sm:$0x1]
          %v791 = vlaneseq
          %v792 = vshrl.u32 %v791, 7
          %v793 = vsub.s32 0, %v792
          %v794 = vrot.slane %v789, %v793
          %v800 = vunpack.c.l.b16 %v784
          %v801 = vunpack.c.l.b16 %v785
          %v802 = vunpack.c.l.b16 %v786
          %v803 = vunpack.c.l.b16 %v787
          %v804 = vpack.c.b16 %v801, %v800
          %v805 = vpack.c.b16 %v803, %v802
          %808 = vmatprep.subr.bf16.mxu0 0
          %809 = vmatpush1.bf16.msra.mxu0 0
          %810 = vmatprep.subr.bf16.mxu0 0
          %811 = vmatpush1.bf16.msra.mxu0 0
          %812 = vmatprep.subr.bf16.mxu0 0
          %813 = vmatpush1.bf16.msra.mxu0 0
          %814 = vmatprep.subr.bf16.mxu0 0
          %815 = vmatpush1.bf16.msra.mxu0 0
          %816 = vmatprep.subr.bf16.mxu0 0
          %817 = vmatpush1.bf16.msra.mxu0 0
          %818 = vmatprep.subr.bf16.mxu0 0
          %819 = vmatpush1.bf16.msra.mxu0 0
          %820 = vmatprep.subr.bf16.mxu0 0
          %821 = vmatpush1.bf16.msra.mxu0 %v805
          %822 = vmatprep.subr.bf16.mxu0 0
          %823 = vmatpush1.bf16.msra.mxu0 %v804
          %824 = vmatprep.subr.bf16.mxu0 0
          %825 = vmatpush2.bf16.msra.mxu0 0
          %826 = vmatprep.subr.bf16.mxu0 0
          %827 = vmatpush2.bf16.msra.mxu0 0
          %828 = vmatprep.subr.bf16.mxu0 0
          %829 = vmatpush2.bf16.msra.mxu0 0
          %830 = vmatprep.subr.bf16.mxu0 0
          %831 = vmatpush2.bf16.msra.mxu0 0
          %832 = vmatprep.subr.bf16.mxu0 0
          %833 = vmatpush2.bf16.msra.mxu0 0
          %834 = vmatprep.subr.bf16.mxu0 0
          %835 = vmatpush2.bf16.msra.mxu0 0
          %836 = vmatprep.subr.bf16.mxu0 0
          %837 = vmatpush2.bf16.msra.mxu0 0
          %838 = vmatprep.subr.bf16.mxu0 0
          %839 = vmatpush2.bf16.msra.mxu0 0
          %840 = vmatprep.mubr.bf16.mxu0 0
          %841 = vmatmul.mubr.bf16.gmra.mxu0 %v469
          %v842 = vpop.f32.mrf.mxu0
          %v843 = vadd.f32 %v794, %v842
          %v844 = vpop.f32.mrf.mxu0
          %v845 = vpop.f32.mrf.mxu0
          %v846 = vpop.f32.mrf.mxu0
          %847 = vdwg.mxu0
          %v848 = vpack.c.bf16 %v843, %v843
          %s849 = scalar_lea.vmem [#allocation3], 8
          %850 = vst.msk [vmem:[%s849] sm:$0xf] %vm512, %v848
          %s851 = scalar_lea.vmem %s4, 48
          %v852 = vld [vmem:[%s851] sm:$0xf]
          %v853 = vld [vmem:[%s851 + $0x4] sm:$0xf]
          %v854 = vld [vmem:[%s851 + $0x8] sm:$0xf]
          %v855 = vld [vmem:[%s851 + $0xc] sm:$0xf]
          %s856 = scalar_lea.vmem %s5, 3
          %v857 = vld [vmem:[%s856] sm:$0x1]
          %v859 = vlaneseq
          %v860 = vshrl.u32 %v859, 7
          %v861 = vsub.s32 0, %v860
          %v862 = vrot.slane %v857, %v861
          %v868 = vunpack.c.l.b16 %v852
          %v869 = vunpack.c.l.b16 %v853
          %v870 = vunpack.c.l.b16 %v854
          %v871 = vunpack.c.l.b16 %v855
          %v872 = vpack.c.b16 %v869, %v868
          %v873 = vpack.c.b16 %v871, %v870
          %876 = vmatprep.subr.bf16.mxu0 0
          %877 = vmatpush1.bf16.msra.mxu0 0
          %878 = vmatprep.subr.bf16.mxu0 0
          %879 = vmatpush1.bf16.msra.mxu0 0
          %880 = vmatprep.subr.bf16.mxu0 0
          %881 = vmatpush1.bf16.msra.mxu0 0
          %882 = vmatprep.subr.bf16.mxu0 0
          %883 = vmatpush1.bf16.msra.mxu0 0
          %884 = vmatprep.subr.bf16.mxu0 0
          %885 = vmatpush1.bf16.msra.mxu0 0
          %886 = vmatprep.subr.bf16.mxu0 0
          %887 = vmatpush1.bf16.msra.mxu0 0
          %888 = vmatprep.subr.bf16.mxu0 0
          %889 = vmatpush1.bf16.msra.mxu0 %v873
          %890 = vmatprep.subr.bf16.mxu0 0
          %891 = vmatpush1.bf16.msra.mxu0 %v872
          %892 = vmatprep.subr.bf16.mxu0 0
          %893 = vmatpush2.bf16.msra.mxu0 0
          %894 = vmatprep.subr.bf16.mxu0 0
          %895 = vmatpush2.bf16.msra.mxu0 0
          %896 = vmatprep.subr.bf16.mxu0 0
          %897 = vmatpush2.bf16.msra.mxu0 0
          %898 = vmatprep.subr.bf16.mxu0 0
          %899 = vmatpush2.bf16.msra.mxu0 0
          %900 = vmatprep.subr.bf16.mxu0 0
          %901 = vmatpush2.bf16.msra.mxu0 0
          %902 = vmatprep.subr.bf16.mxu0 0
          %903 = vmatpush2.bf16.msra.mxu0 0
          %904 = vmatprep.subr.bf16.mxu0 0
          %905 = vmatpush2.bf16.msra.mxu0 0
          %906 = vmatprep.subr.bf16.mxu0 0
          %907 = vmatpush2.bf16.msra.mxu0 0
          %908 = vmatprep.mubr.bf16.mxu0 0
          %909 = vmatmul.mubr.bf16.gmra.mxu0 %v469
          %v910 = vpop.f32.mrf.mxu0
          %v911 = vadd.f32 %v862, %v910
          %v912 = vpop.f32.mrf.mxu0
          %v913 = vpop.f32.mrf.mxu0
          %v914 = vpop.f32.mrf.mxu0
          %915 = vdwg.mxu0
          %v916 = vpack.c.bf16 %v911, %v911
          %s917 = scalar_lea.vmem [#allocation2], 12
          %918 = vst.msk [vmem:[%s917] sm:$0xf] %vm512, %v916
          %s919 = scalar_lea.vmem %s6, 48
          %v920 = vld [vmem:[%s919] sm:$0xf]
          %v921 = vld [vmem:[%s919 + $0x4] sm:$0xf]
          %v922 = vld [vmem:[%s919 + $0x8] sm:$0xf]
          %v923 = vld [vmem:[%s919 + $0xc] sm:$0xf]
          %s924 = scalar_lea.vmem %s7, 3
          %v925 = vld [vmem:[%s924] sm:$0x1]
          %v927 = vlaneseq
          %v928 = vshrl.u32 %v927, 7
          %v929 = vsub.s32 0, %v928
          %v930 = vrot.slane %v925, %v929
          %v936 = vunpack.c.l.b16 %v920
          %v937 = vunpack.c.l.b16 %v921
          %v938 = vunpack.c.l.b16 %v922
          %v939 = vunpack.c.l.b16 %v923
          %v940 = vpack.c.b16 %v937, %v936
          %v941 = vpack.c.b16 %v939, %v938
          %944 = vmatprep.subr.bf16.mxu0 0
          %945 = vmatpush1.bf16.msra.mxu0 0
          %946 = vmatprep.subr.bf16.mxu0 0
          %947 = vmatpush1.bf16.msra.mxu0 0
          %948 = vmatprep.subr.bf16.mxu0 0
          %949 = vmatpush1.bf16.msra.mxu0 0
          %950 = vmatprep.subr.bf16.mxu0 0
          %951 = vmatpush1.bf16.msra.mxu0 0
          %952 = vmatprep.subr.bf16.mxu0 0
          %953 = vmatpush1.bf16.msra.mxu0 0
          %954 = vmatprep.subr.bf16.mxu0 0
          %955 = vmatpush1.bf16.msra.mxu0 0
          %956 = vmatprep.subr.bf16.mxu0 0
          %957 = vmatpush1.bf16.msra.mxu0 %v941
          %958 = vmatprep.subr.bf16.mxu0 0
          %959 = vmatpush1.bf16.msra.mxu0 %v940
          %960 = vmatprep.subr.bf16.mxu0 0
          %961 = vmatpush2.bf16.msra.mxu0 0
          %962 = vmatprep.subr.bf16.mxu0 0
          %963 = vmatpush2.bf16.msra.mxu0 0
          %964 = vmatprep.subr.bf16.mxu0 0
          %965 = vmatpush2.bf16.msra.mxu0 0
          %966 = vmatprep.subr.bf16.mxu0 0
          %967 = vmatpush2.bf16.msra.mxu0 0
          %968 = vmatprep.subr.bf16.mxu0 0
          %969 = vmatpush2.bf16.msra.mxu0 0
          %970 = vmatprep.subr.bf16.mxu0 0
          %971 = vmatpush2.bf16.msra.mxu0 0
          %972 = vmatprep.subr.bf16.mxu0 0
          %973 = vmatpush2.bf16.msra.mxu0 0
          %974 = vmatprep.subr.bf16.mxu0 0
          %975 = vmatpush2.bf16.msra.mxu0 0
          %976 = vmatprep.mubr.bf16.mxu0 0
          %977 = vmatmul.mubr.bf16.gmra.mxu0 %v469
          %v978 = vpop.f32.mrf.mxu0
          %v979 = vadd.f32 %v930, %v978
          %v980 = vpop.f32.mrf.mxu0
          %v981 = vpop.f32.mrf.mxu0
          %v982 = vpop.f32.mrf.mxu0
          %983 = vdwg.mxu0
          %v984 = vpack.c.bf16 %v979, %v979
          %s985 = scalar_lea.vmem [#allocation3], 12
          %986 = vst.msk [vmem:[%s985] sm:$0xf] %vm512, %v984
        $region72: #{tpu_custom_call.1} parent=67 // pred_fallthru
          _
        %v987 = vld [vmem:[%s433] sm:$0xff]
        %v988 = vpack.c.bf16 %v987, %v987
        %v989 = vld [vmem:[%s436] sm:$0x1]
        %v990 = vld [vmem:[%s2] sm:$0xf]
        %v991 = vld [vmem:[%s2 + $0x4] sm:$0xf]
        %v992 = vld [vmem:[%s2 + $0x8] sm:$0xf]
        %v993 = vld [vmem:[%s2 + $0xc] sm:$0xf]
        %v994 = vld [vmem:[%s3] sm:$0x1]
        %v996 = vlaneseq
        %v997 = vshrl.u32 %v996, 7
        %v998 = vsub.s32 0, %v997
        %v999 = vrot.slane %v994, %v998
        %v1005 = vunpack.c.l.b16 %v990
        %v1006 = vunpack.c.l.b16 %v991
        %v1007 = vunpack.c.l.b16 %v992
        %v1008 = vunpack.c.l.b16 %v993
        %v1009 = vpack.c.b16 %v1006, %v1005
        %v1010 = vpack.c.b16 %v1008, %v1007
        %vm1013 = vcmask 261120
        %v1015 = vsel %vm1013, %v988, 0
        %1017 = vmatprep.subr.bf16.mxu0 0
        %1018 = vmatpush1.bf16.msra.mxu0 0
        %1019 = vmatprep.subr.bf16.mxu0 0
        %1020 = vmatpush1.bf16.msra.mxu0 0
        %1021 = vmatprep.subr.bf16.mxu0 0
        %1022 = vmatpush1.bf16.msra.mxu0 0
        %1023 = vmatprep.subr.bf16.mxu0 0
        %1024 = vmatpush1.bf16.msra.mxu0 0
        %1025 = vmatprep.subr.bf16.mxu0 0
        %1026 = vmatpush1.bf16.msra.mxu0 0
        %1027 = vmatprep.subr.bf16.mxu0 0
        %1028 = vmatpush1.bf16.msra.mxu0 0
        %1029 = vmatprep.subr.bf16.mxu0 0
        %1030 = vmatpush1.bf16.msra.mxu0 %v1010
        %1031 = vmatprep.subr.bf16.mxu0 0
        %1032 = vmatpush1.bf16.msra.mxu0 %v1009
        %1033 = vmatprep.subr.bf16.mxu0 0
        %1034 = vmatpush2.bf16.msra.mxu0 0
        %1035 = vmatprep.subr.bf16.mxu0 0
        %1036 = vmatpush2.bf16.msra.mxu0 0
        %1037 = vmatprep.subr.bf16.mxu0 0
        %1038 = vmatpush2.bf16.msra.mxu0 0
        %1039 = vmatprep.subr.bf16.mxu0 0
        %1040 = vmatpush2.bf16.msra.mxu0 0
        %1041 = vmatprep.subr.bf16.mxu0 0
        %1042 = vmatpush2.bf16.msra.mxu0 0
        %1043 = vmatprep.subr.bf16.mxu0 0
        %1044 = vmatpush2.bf16.msra.mxu0 0
        %1045 = vmatprep.subr.bf16.mxu0 0
        %1046 = vmatpush2.bf16.msra.mxu0 0
        %1047 = vmatprep.subr.bf16.mxu0 0
        %1048 = vmatpush2.bf16.msra.mxu0 0
        %1049 = vmatprep.mubr.bf16.mxu0 0
        %1050 = vmatmul.mubr.bf16.gmra.mxu0 %v1015
        %v1051 = vpop.f32.mrf.mxu0
        %v1052 = vadd.f32 %v999, %v1051
        %v1053 = vpop.f32.mrf.mxu0
        %v1054 = vpop.f32.mrf.mxu0
        %v1055 = vpop.f32.mrf.mxu0
        %1056 = vdwg.mxu0
        %v1057 = vpack.c.bf16 %v1052, %v1052
        %v1058 = vld [vmem:[#allocation2] sm:$0xf]
        %v1060 = vlaneseq
        %v1061 = vshrl.u32 %v1060, 7
        %v1062 = vsub.s32 0, %v1061
        %v1063 = vrot.slane %v989, %v1062
        %vm1065 = vcmask 64512
        %v1067 = vsel %vm1065, %v1057, 0
        %v1070 = vsel %vm1065, %v1058, 0
        %1072 = vmatprep.subr.bf16.mxu0 0
        %1073 = vmatpush1.bf16.xpose.msra.mxu0 0
        %1074 = vmatprep.subr.bf16.mxu0 0
        %1075 = vmatpush1.bf16.xpose.msra.mxu0 0
        %1076 = vmatprep.subr.bf16.mxu0 0
        %1077 = vmatpush1.bf16.xpose.msra.mxu0 0
        %1078 = vmatprep.subr.bf16.mxu0 0
        %1079 = vmatpush1.bf16.xpose.msra.mxu0 0
        %1080 = vmatprep.subr.bf16.mxu0 0
        %1081 = vmatpush1.bf16.xpose.msra.mxu0 0
        %1082 = vmatprep.subr.bf16.mxu0 0
        %1083 = vmatpush1.bf16.xpose.msra.mxu0 0
        %1084 = vmatprep.subr.bf16.mxu0 0
        %1085 = vmatpush1.bf16.xpose.msra.mxu0 0
        %1086 = vmatprep.subr.bf16.mxu0 0
        %1087 = vmatpush1.bf16.xpose.msra.mxu0 %v1070
        %1088 = vmatprep.subr.bf16.mxu0 0
        %1089 = vmatpush2.bf16.xpose.msra.mxu0 0
        %1090 = vmatprep.subr.bf16.mxu0 0
        %1091 = vmatpush2.bf16.xpose.msra.mxu0 0
        %1092 = vmatprep.subr.bf16.mxu0 0
        %1093 = vmatpush2.bf16.xpose.msra.mxu0 0
        %1094 = vmatprep.subr.bf16.mxu0 0
        %1095 = vmatpush2.bf16.xpose.msra.mxu0 0
        %1096 = vmatprep.subr.bf16.mxu0 0
        %1097 = vmatpush2.bf16.xpose.msra.mxu0 0
        %1098 = vmatprep.subr.bf16.mxu0 0
        %1099 = vmatpush2.bf16.xpose.msra.mxu0 0
        %1100 = vmatprep.subr.bf16.mxu0 0
        %1101 = vmatpush2.bf16.xpose.msra.mxu0 0
        %1102 = vmatprep.subr.bf16.mxu0 0
        %1103 = vmatpush2.bf16.xpose.msra.mxu0 0
        %1104 = vmatprep.mubr.bf16.mxu0 0
        %1105 = vmatmul.mubr.bf16.gmra.mxu0 %v1067
        %v1106 = vpop.f32.mrf.mxu0
        %v1107 = vadd.f32 %v1063, %v1106
        %v1108 = vpop.f32.mrf.mxu0
        %v1109 = vpop.f32.mrf.mxu0
        %v1110 = vpop.f32.mrf.mxu0
        %1111 = vdwg.mxu0
        %v1112 = vsel %vm1065, %v1107, -inf
        %1113 = vmax.xlane.f32.xlu0 %v1112
        %v1114 = vpop.xlane.xlu0 %1113
        %v1115 = vsub.f32 %v1107, %v1114
        %v1116 = vmul.f32 %v1115, 1.442695
        %v1117 = vpow.pop %v1116
        %v1118 = vsel %vm1065, %v1117, 0.0
        %1119 = vadd.xlane.f32.xlu0 %v1118
        %v1120 = vpop.xlane.xlu0 %1119
        %v1121 = vrcp.pop %v1120
        %v1122 = vpack.c.bf16 %v1117, %v1117
        %v1123 = vld [vmem:[#allocation3] sm:$0xf]
        %v1125 = vsel %vm1065, %v1122, 0
        %vm1127 = vcmask 1043456
        %v1129 = vsel %vm1127, %v1123, 0
        %1131 = vmatprep.subr.bf16.mxu0 0
        %1132 = vmatpush1.bf16.msra.mxu0 0
        %1133 = vmatprep.subr.bf16.mxu0 0
        %1134 = vmatpush1.bf16.msra.mxu0 0
        %1135 = vmatprep.subr.bf16.mxu0 0
        %1136 = vmatpush1.bf16.msra.mxu0 0
        %1137 = vmatprep.subr.bf16.mxu0 0
        %1138 = vmatpush1.bf16.msra.mxu0 0
        %1139 = vmatprep.subr.bf16.mxu0 0
        %1140 = vmatpush1.bf16.msra.mxu0 0
        %1141 = vmatprep.subr.bf16.mxu0 0
        %1142 = vmatpush1.bf16.msra.mxu0 0
        %1143 = vmatprep.subr.bf16.mxu0 0
        %1144 = vmatpush1.bf16.msra.mxu0 0
        %1145 = vmatprep.subr.bf16.mxu0 0
        %1146 = vmatpush1.bf16.msra.mxu0 %v1129
        %1147 = vmatprep.subr.bf16.mxu0 0
        %1148 = vmatpush2.bf16.msra.mxu0 0
        %1149 = vmatprep.subr.bf16.mxu0 0
        %1150 = vmatpush2.bf16.msra.mxu0 0
        %1151 = vmatprep.subr.bf16.mxu0 0
        %1152 = vmatpush2.bf16.msra.mxu0 0
        %1153 = vmatprep.subr.bf16.mxu0 0
        %1154 = vmatpush2.bf16.msra.mxu0 0
        %1155 = vmatprep.subr.bf16.mxu0 0
        %1156 = vmatpush2.bf16.msra.mxu0 0
        %1157 = vmatprep.subr.bf16.mxu0 0
        %1158 = vmatpush2.bf16.msra.mxu0 0
        %1159 = vmatprep.subr.bf16.mxu0 0
        %1160 = vmatpush2.bf16.msra.mxu0 0
        %1161 = vmatprep.subr.bf16.mxu0 0
        %1162 = vmatpush2.bf16.msra.mxu0 0
        %1163 = vmatprep.mubr.bf16.mxu0 0
        %1164 = vmatmul.mubr.bf16.gmra.mxu0 %v1125
        %v1165 = vpop.f32.mrf.mxu0
        %v1166 = vadd.f32 0.0, %v1165
        %v1167 = vpop.f32.mrf.mxu0
        %v1168 = vpop.f32.mrf.mxu0
        %v1169 = vpop.f32.mrf.mxu0
        %1170 = vdwg.mxu0
        %v1171 = vmul.f32 %v1166, %v1121
        %v1172 = vpack.c.bf16 %v1171, %v1171
        %s1173 = scalar_lea.vmem %s2, 16
        %v1174 = vld [vmem:[%s1173] sm:$0xf]
        %v1175 = vld [vmem:[%s1173 + $0x4] sm:$0xf]
        %v1176 = vld [vmem:[%s1173 + $0x8] sm:$0xf]
        %v1177 = vld [vmem:[%s1173 + $0xc] sm:$0xf]
        %s1178 = scalar_lea.vmem %s3, 1
        %v1179 = vld [vmem:[%s1178] sm:$0x1]
        %v1181 = vlaneseq
        %v1182 = vshrl.u32 %v1181, 7
        %v1183 = vsub.s32 0, %v1182
        %v1184 = vrot.slane %v1179, %v1183
        %v1190 = vunpack.c.l.b16 %v1174
        %v1191 = vunpack.c.l.b16 %v1175
        %v1192 = vunpack.c.l.b16 %v1176
        %v1193 = vunpack.c.l.b16 %v1177
        %v1194 = vpack.c.b16 %v1191, %v1190
        %v1195 = vpack.c.b16 %v1193, %v1192
        %1198 = vmatprep.subr.bf16.mxu0 0
        %1199 = vmatpush1.bf16.msra.mxu0 0
        %1200 = vmatprep.subr.bf16.mxu0 0
        %1201 = vmatpush1.bf16.msra.mxu0 0
        %1202 = vmatprep.subr.bf16.mxu0 0
        %1203 = vmatpush1.bf16.msra.mxu0 0
        %1204 = vmatprep.subr.bf16.mxu0 0
        %1205 = vmatpush1.bf16.msra.mxu0 0
        %1206 = vmatprep.subr.bf16.mxu0 0
        %1207 = vmatpush1.bf16.msra.mxu0 0
        %1208 = vmatprep.subr.bf16.mxu0 0
        %1209 = vmatpush1.bf16.msra.mxu0 0
        %1210 = vmatprep.subr.bf16.mxu0 0
        %1211 = vmatpush1.bf16.msra.mxu0 %v1195
        %1212 = vmatprep.subr.bf16.mxu0 0
        %1213 = vmatpush1.bf16.msra.mxu0 %v1194
        %1214 = vmatprep.subr.bf16.mxu0 0
        %1215 = vmatpush2.bf16.msra.mxu0 0
        %1216 = vmatprep.subr.bf16.mxu0 0
        %1217 = vmatpush2.bf16.msra.mxu0 0
        %1218 = vmatprep.subr.bf16.mxu0 0
        %1219 = vmatpush2.bf16.msra.mxu0 0
        %1220 = vmatprep.subr.bf16.mxu0 0
        %1221 = vmatpush2.bf16.msra.mxu0 0
        %1222 = vmatprep.subr.bf16.mxu0 0
        %1223 = vmatpush2.bf16.msra.mxu0 0
        %1224 = vmatprep.subr.bf16.mxu0 0
        %1225 = vmatpush2.bf16.msra.mxu0 0
        %1226 = vmatprep.subr.bf16.mxu0 0
        %1227 = vmatpush2.bf16.msra.mxu0 0
        %1228 = vmatprep.subr.bf16.mxu0 0
        %1229 = vmatpush2.bf16.msra.mxu0 0
        %1230 = vmatprep.mubr.bf16.mxu0 0
        %1231 = vmatmul.mubr.bf16.gmra.mxu0 %v1015
        %v1232 = vpop.f32.mrf.mxu0
        %v1233 = vadd.f32 %v1184, %v1232
        %v1234 = vpop.f32.mrf.mxu0
        %v1235 = vpop.f32.mrf.mxu0
        %v1236 = vpop.f32.mrf.mxu0
        %1237 = vdwg.mxu0
        %v1238 = vpack.c.bf16 %v1233, %v1233
        %s1239 = scalar_lea.vmem [#allocation2], 4
        %v1240 = vld [vmem:[%s1239] sm:$0xf]
        %v1242 = vsel %vm1065, %v1238, 0
        %v1245 = vsel %vm1065, %v1240, 0
        %1247 = vmatprep.subr.bf16.mxu0 0
        %1248 = vmatpush1.bf16.xpose.msra.mxu0 0
        %1249 = vmatprep.subr.bf16.mxu0 0
        %1250 = vmatpush1.bf16.xpose.msra.mxu0 0
        %1251 = vmatprep.subr.bf16.mxu0 0
        %1252 = vmatpush1.bf16.xpose.msra.mxu0 0
        %1253 = vmatprep.subr.bf16.mxu0 0
        %1254 = vmatpush1.bf16.xpose.msra.mxu0 0
        %1255 = vmatprep.subr.bf16.mxu0 0
        %1256 = vmatpush1.bf16.xpose.msra.mxu0 0
        %1257 = vmatprep.subr.bf16.mxu0 0
        %1258 = vmatpush1.bf16.xpose.msra.mxu0 0
        %1259 = vmatprep.subr.bf16.mxu0 0
        %1260 = vmatpush1.bf16.xpose.msra.mxu0 0
        %1261 = vmatprep.subr.bf16.mxu0 0
        %1262 = vmatpush1.bf16.xpose.msra.mxu0 %v1245
        %1263 = vmatprep.subr.bf16.mxu0 0
        %1264 = vmatpush2.bf16.xpose.msra.mxu0 0
        %1265 = vmatprep.subr.bf16.mxu0 0
        %1266 = vmatpush2.bf16.xpose.msra.mxu0 0
        %1267 = vmatprep.subr.bf16.mxu0 0
        %1268 = vmatpush2.bf16.xpose.msra.mxu0 0
        %1269 = vmatprep.subr.bf16.mxu0 0
        %1270 = vmatpush2.bf16.xpose.msra.mxu0 0
        %1271 = vmatprep.subr.bf16.mxu0 0
        %1272 = vmatpush2.bf16.xpose.msra.mxu0 0
        %1273 = vmatprep.subr.bf16.mxu0 0
        %1274 = vmatpush2.bf16.xpose.msra.mxu0 0
        %1275 = vmatprep.subr.bf16.mxu0 0
        %1276 = vmatpush2.bf16.xpose.msra.mxu0 0
        %1277 = vmatprep.subr.bf16.mxu0 0
        %1278 = vmatpush2.bf16.xpose.msra.mxu0 0
        %1279 = vmatprep.mubr.bf16.mxu0 0
        %1280 = vmatmul.mubr.bf16.gmra.mxu0 %v1242
        %v1281 = vpop.f32.mrf.mxu0
        %v1282 = vadd.f32 %v1063, %v1281
        %v1283 = vpop.f32.mrf.mxu0
        %v1284 = vpop.f32.mrf.mxu0
        %v1285 = vpop.f32.mrf.mxu0
        %1286 = vdwg.mxu0
        %v1287 = vsel %vm1065, %v1282, -inf
        %1288 = vmax.xlane.f32.xlu0 %v1287
        %v1289 = vpop.xlane.xlu0 %1288
        %v1290 = vsub.f32 %v1282, %v1289
        %v1291 = vmul.f32 %v1290, 1.442695
        %v1292 = vpow.pop %v1291
        %v1293 = vsel %vm1065, %v1292, 0.0
        %1294 = vadd.xlane.f32.xlu0 %v1293
        %v1295 = vpop.xlane.xlu0 %1294
        %v1296 = vrcp.pop %v1295
        %v1297 = vpack.c.bf16 %v1292, %v1292
        %s1298 = scalar_lea.vmem [#allocation3], 4
        %v1299 = vld [vmem:[%s1298] sm:$0xf]
        %v1301 = vsel %vm1065, %v1297, 0
        %v1304 = vsel %vm1127, %v1299, 0
        %1306 = vmatprep.subr.bf16.mxu0 0
        %1307 = vmatpush1.bf16.msra.mxu0 0
        %1308 = vmatprep.subr.bf16.mxu0 0
        %1309 = vmatpush1.bf16.msra.mxu0 0
        %1310 = vmatprep.subr.bf16.mxu0 0
        %1311 = vmatpush1.bf16.msra.mxu0 0
        %1312 = vmatprep.subr.bf16.mxu0 0
        %1313 = vmatpush1.bf16.msra.mxu0 0
        %1314 = vmatprep.subr.bf16.mxu0 0
        %1315 = vmatpush1.bf16.msra.mxu0 0
        %1316 = vmatprep.subr.bf16.mxu0 0
        %1317 = vmatpush1.bf16.msra.mxu0 0
        %1318 = vmatprep.subr.bf16.mxu0 0
        %1319 = vmatpush1.bf16.msra.mxu0 0
        %1320 = vmatprep.subr.bf16.mxu0 0
        %1321 = vmatpush1.bf16.msra.mxu0 %v1304
        %1322 = vmatprep.subr.bf16.mxu0 0
        %1323 = vmatpush2.bf16.msra.mxu0 0
        %1324 = vmatprep.subr.bf16.mxu0 0
        %1325 = vmatpush2.bf16.msra.mxu0 0
        %1326 = vmatprep.subr.bf16.mxu0 0
        %1327 = vmatpush2.bf16.msra.mxu0 0
        %1328 = vmatprep.subr.bf16.mxu0 0
        %1329 = vmatpush2.bf16.msra.mxu0 0
        %1330 = vmatprep.subr.bf16.mxu0 0
        %1331 = vmatpush2.bf16.msra.mxu0 0
        %1332 = vmatprep.subr.bf16.mxu0 0
        %1333 = vmatpush2.bf16.msra.mxu0 0
        %1334 = vmatprep.subr.bf16.mxu0 0
        %1335 = vmatpush2.bf16.msra.mxu0 0
        %1336 = vmatprep.subr.bf16.mxu0 0
        %1337 = vmatpush2.bf16.msra.mxu0 0
        %1338 = vmatprep.mubr.bf16.mxu0 0
        %1339 = vmatmul.mubr.bf16.gmra.mxu0 %v1301
        %v1340 = vpop.f32.mrf.mxu0
        %v1341 = vadd.f32 0.0, %v1340
        %v1342 = vpop.f32.mrf.mxu0
        %v1343 = vpop.f32.mrf.mxu0
        %v1344 = vpop.f32.mrf.mxu0
        %1345 = vdwg.mxu0
        %v1346 = vmul.f32 %v1341, %v1296
        %v1347 = vpack.c.bf16 %v1346, %v1346
        %s1348 = scalar_lea.vmem %s2, 32
        %v1349 = vld [vmem:[%s1348] sm:$0xf]
        %v1350 = vld [vmem:[%s1348 + $0x4] sm:$0xf]
        %v1351 = vld [vmem:[%s1348 + $0x8] sm:$0xf]
        %v1352 = vld [vmem:[%s1348 + $0xc] sm:$0xf]
        %s1353 = scalar_lea.vmem %s3, 2
        %v1354 = vld [vmem:[%s1353] sm:$0x1]
        %v1356 = vlaneseq
        %v1357 = vshrl.u32 %v1356, 7
        %v1358 = vsub.s32 0, %v1357
        %v1359 = vrot.slane %v1354, %v1358
        %v1365 = vunpack.c.l.b16 %v1349
        %v1366 = vunpack.c.l.b16 %v1350
        %v1367 = vunpack.c.l.b16 %v1351
        %v1368 = vunpack.c.l.b16 %v1352
        %v1369 = vpack.c.b16 %v1366, %v1365
        %v1370 = vpack.c.b16 %v1368, %v1367
        %1373 = vmatprep.subr.bf16.mxu0 0
        %1374 = vmatpush1.bf16.msra.mxu0 0
        %1375 = vmatprep.subr.bf16.mxu0 0
        %1376 = vmatpush1.bf16.msra.mxu0 0
        %1377 = vmatprep.subr.bf16.mxu0 0
        %1378 = vmatpush1.bf16.msra.mxu0 0
        %1379 = vmatprep.subr.bf16.mxu0 0
        %1380 = vmatpush1.bf16.msra.mxu0 0
        %1381 = vmatprep.subr.bf16.mxu0 0
        %1382 = vmatpush1.bf16.msra.mxu0 0
        %1383 = vmatprep.subr.bf16.mxu0 0
        %1384 = vmatpush1.bf16.msra.mxu0 0
        %1385 = vmatprep.subr.bf16.mxu0 0
        %1386 = vmatpush1.bf16.msra.mxu0 %v1370
        %1387 = vmatprep.subr.bf16.mxu0 0
        %1388 = vmatpush1.bf16.msra.mxu0 %v1369
        %1389 = vmatprep.subr.bf16.mxu0 0
        %1390 = vmatpush2.bf16.msra.mxu0 0
        %1391 = vmatprep.subr.bf16.mxu0 0
        %1392 = vmatpush2.bf16.msra.mxu0 0
        %1393 = vmatprep.subr.bf16.mxu0 0
        %1394 = vmatpush2.bf16.msra.mxu0 0
        %1395 = vmatprep.subr.bf16.mxu0 0
        %1396 = vmatpush2.bf16.msra.mxu0 0
        %1397 = vmatprep.subr.bf16.mxu0 0
        %1398 = vmatpush2.bf16.msra.mxu0 0
        %1399 = vmatprep.subr.bf16.mxu0 0
        %1400 = vmatpush2.bf16.msra.mxu0 0
        %1401 = vmatprep.subr.bf16.mxu0 0
        %1402 = vmatpush2.bf16.msra.mxu0 0
        %1403 = vmatprep.subr.bf16.mxu0 0
        %1404 = vmatpush2.bf16.msra.mxu0 0
        %1405 = vmatprep.mubr.bf16.mxu0 0
        %1406 = vmatmul.mubr.bf16.gmra.mxu0 %v1015
        %v1407 = vpop.f32.mrf.mxu0
        %v1408 = vadd.f32 %v1359, %v1407
        %v1409 = vpop.f32.mrf.mxu0
        %v1410 = vpop.f32.mrf.mxu0
        %v1411 = vpop.f32.mrf.mxu0
        %1412 = vdwg.mxu0
        %v1413 = vpack.c.bf16 %v1408, %v1408
        %s1414 = scalar_lea.vmem [#allocation2], 8
        %v1415 = vld [vmem:[%s1414] sm:$0xf]
        %v1417 = vsel %vm1065, %v1413, 0
        %v1420 = vsel %vm1065, %v1415, 0
        %1422 = vmatprep.subr.bf16.mxu0 0
        %1423 = vmatpush1.bf16.xpose.msra.mxu0 0
        %1424 = vmatprep.subr.bf16.mxu0 0
        %1425 = vmatpush1.bf16.xpose.msra.mxu0 0
        %1426 = vmatprep.subr.bf16.mxu0 0
        %1427 = vmatpush1.bf16.xpose.msra.mxu0 0
        %1428 = vmatprep.subr.bf16.mxu0 0
        %1429 = vmatpush1.bf16.xpose.msra.mxu0 0
        %1430 = vmatprep.subr.bf16.mxu0 0
        %1431 = vmatpush1.bf16.xpose.msra.mxu0 0
        %1432 = vmatprep.subr.bf16.mxu0 0
        %1433 = vmatpush1.bf16.xpose.msra.mxu0 0
        %1434 = vmatprep.subr.bf16.mxu0 0
        %1435 = vmatpush1.bf16.xpose.msra.mxu0 0
        %1436 = vmatprep.subr.bf16.mxu0 0
        %1437 = vmatpush1.bf16.xpose.msra.mxu0 %v1420
        %1438 = vmatprep.subr.bf16.mxu0 0
        %1439 = vmatpush2.bf16.xpose.msra.mxu0 0
        %1440 = vmatprep.subr.bf16.mxu0 0
        %1441 = vmatpush2.bf16.xpose.msra.mxu0 0
        %1442 = vmatprep.subr.bf16.mxu0 0
        %1443 = vmatpush2.bf16.xpose.msra.mxu0 0
        %1444 = vmatprep.subr.bf16.mxu0 0
        %1445 = vmatpush2.bf16.xpose.msra.mxu0 0
        %1446 = vmatprep.subr.bf16.mxu0 0
        %1447 = vmatpush2.bf16.xpose.msra.mxu0 0
        %1448 = vmatprep.subr.bf16.mxu0 0
        %1449 = vmatpush2.bf16.xpose.msra.mxu0 0
        %1450 = vmatprep.subr.bf16.mxu0 0
        %1451 = vmatpush2.bf16.xpose.msra.mxu0 0
        %1452 = vmatprep.subr.bf16.mxu0 0
        %1453 = vmatpush2.bf16.xpose.msra.mxu0 0
        %1454 = vmatprep.mubr.bf16.mxu0 0
        %1455 = vmatmul.mubr.bf16.gmra.mxu0 %v1417
        %v1456 = vpop.f32.mrf.mxu0
        %v1457 = vadd.f32 %v1063, %v1456
        %v1458 = vpop.f32.mrf.mxu0
        %v1459 = vpop.f32.mrf.mxu0
        %v1460 = vpop.f32.mrf.mxu0
        %1461 = vdwg.mxu0
        %v1462 = vsel %vm1065, %v1457, -inf
        %1463 = vmax.xlane.f32.xlu0 %v1462
        %v1464 = vpop.xlane.xlu0 %1463
        %v1465 = vsub.f32 %v1457, %v1464
        %v1466 = vmul.f32 %v1465, 1.442695
        %v1467 = vpow.pop %v1466
        %v1468 = vsel %vm1065, %v1467, 0.0
        %1469 = vadd.xlane.f32.xlu0 %v1468
        %v1470 = vpop.xlane.xlu0 %1469
        %v1471 = vrcp.pop %v1470
        %v1472 = vpack.c.bf16 %v1467, %v1467
        %s1473 = scalar_lea.vmem [#allocation3], 8
        %v1474 = vld [vmem:[%s1473] sm:$0xf]
        %v1476 = vsel %vm1065, %v1472, 0
        %v1479 = vsel %vm1127, %v1474, 0
        %1481 = vmatprep.subr.bf16.mxu0 0
        %1482 = vmatpush1.bf16.msra.mxu0 0
        %1483 = vmatprep.subr.bf16.mxu0 0
        %1484 = vmatpush1.bf16.msra.mxu0 0
        %1485 = vmatprep.subr.bf16.mxu0 0
        %1486 = vmatpush1.bf16.msra.mxu0 0
        %1487 = vmatprep.subr.bf16.mxu0 0
        %1488 = vmatpush1.bf16.msra.mxu0 0
        %1489 = vmatprep.subr.bf16.mxu0 0
        %1490 = vmatpush1.bf16.msra.mxu0 0
        %1491 = vmatprep.subr.bf16.mxu0 0
        %1492 = vmatpush1.bf16.msra.mxu0 0
        %1493 = vmatprep.subr.bf16.mxu0 0
        %1494 = vmatpush1.bf16.msra.mxu0 0
        %1495 = vmatprep.subr.bf16.mxu0 0
        %1496 = vmatpush1.bf16.msra.mxu0 %v1479
        %1497 = vmatprep.subr.bf16.mxu0 0
        %1498 = vmatpush2.bf16.msra.mxu0 0
        %1499 = vmatprep.subr.bf16.mxu0 0
        %1500 = vmatpush2.bf16.msra.mxu0 0
        %1501 = vmatprep.subr.bf16.mxu0 0
        %1502 = vmatpush2.bf16.msra.mxu0 0
        %1503 = vmatprep.subr.bf16.mxu0 0
        %1504 = vmatpush2.bf16.msra.mxu0 0
        %1505 = vmatprep.subr.bf16.mxu0 0
        %1506 = vmatpush2.bf16.msra.mxu0 0
        %1507 = vmatprep.subr.bf16.mxu0 0
        %1508 = vmatpush2.bf16.msra.mxu0 0
        %1509 = vmatprep.subr.bf16.mxu0 0
        %1510 = vmatpush2.bf16.msra.mxu0 0
        %1511 = vmatprep.subr.bf16.mxu0 0
        %1512 = vmatpush2.bf16.msra.mxu0 0
        %1513 = vmatprep.mubr.bf16.mxu0 0
        %1514 = vmatmul.mubr.bf16.gmra.mxu0 %v1476
        %v1515 = vpop.f32.mrf.mxu0
        %v1516 = vadd.f32 0.0, %v1515
        %v1517 = vpop.f32.mrf.mxu0
        %v1518 = vpop.f32.mrf.mxu0
        %v1519 = vpop.f32.mrf.mxu0
        %1520 = vdwg.mxu0
        %v1521 = vmul.f32 %v1516, %v1471
        %v1522 = vpack.c.bf16 %v1521, %v1521
        %s1523 = scalar_lea.vmem %s2, 48
        %v1524 = vld [vmem:[%s1523] sm:$0xf]
        %v1525 = vld [vmem:[%s1523 + $0x4] sm:$0xf]
        %v1526 = vld [vmem:[%s1523 + $0x8] sm:$0xf]
        %v1527 = vld [vmem:[%s1523 + $0xc] sm:$0xf]
        %s1528 = scalar_lea.vmem %s3, 3
        %v1529 = vld [vmem:[%s1528] sm:$0x1]
        %v1531 = vlaneseq
        %v1532 = vshrl.u32 %v1531, 7
        %v1533 = vsub.s32 0, %v1532
        %v1534 = vrot.slane %v1529, %v1533
        %v1540 = vunpack.c.l.b16 %v1524
        %v1541 = vunpack.c.l.b16 %v1525
        %v1542 = vunpack.c.l.b16 %v1526
        %v1543 = vunpack.c.l.b16 %v1527
        %v1544 = vpack.c.b16 %v1541, %v1540
        %v1545 = vpack.c.b16 %v1543, %v1542
        %1548 = vmatprep.subr.bf16.mxu0 0
        %1549 = vmatpush1.bf16.msra.mxu0 0
        %1550 = vmatprep.subr.bf16.mxu0 0
        %1551 = vmatpush1.bf16.msra.mxu0 0
        %1552 = vmatprep.subr.bf16.mxu0 0
        %1553 = vmatpush1.bf16.msra.mxu0 0
        %1554 = vmatprep.subr.bf16.mxu0 0
        %1555 = vmatpush1.bf16.msra.mxu0 0
        %1556 = vmatprep.subr.bf16.mxu0 0
        %1557 = vmatpush1.bf16.msra.mxu0 0
        %1558 = vmatprep.subr.bf16.mxu0 0
        %1559 = vmatpush1.bf16.msra.mxu0 0
        %1560 = vmatprep.subr.bf16.mxu0 0
        %1561 = vmatpush1.bf16.msra.mxu0 %v1545
        %1562 = vmatprep.subr.bf16.mxu0 0
        %1563 = vmatpush1.bf16.msra.mxu0 %v1544
        %1564 = vmatprep.subr.bf16.mxu0 0
        %1565 = vmatpush2.bf16.msra.mxu0 0
        %1566 = vmatprep.subr.bf16.mxu0 0
        %1567 = vmatpush2.bf16.msra.mxu0 0
        %1568 = vmatprep.subr.bf16.mxu0 0
        %1569 = vmatpush2.bf16.msra.mxu0 0
        %1570 = vmatprep.subr.bf16.mxu0 0
        %1571 = vmatpush2.bf16.msra.mxu0 0
        %1572 = vmatprep.subr.bf16.mxu0 0
        %1573 = vmatpush2.bf16.msra.mxu0 0
        %1574 = vmatprep.subr.bf16.mxu0 0
        %1575 = vmatpush2.bf16.msra.mxu0 0
        %1576 = vmatprep.subr.bf16.mxu0 0
        %1577 = vmatpush2.bf16.msra.mxu0 0
        %1578 = vmatprep.subr.bf16.mxu0 0
        %1579 = vmatpush2.bf16.msra.mxu0 0
        %1580 = vmatprep.mubr.bf16.mxu0 0
        %1581 = vmatmul.mubr.bf16.gmra.mxu0 %v1015
        %v1582 = vpop.f32.mrf.mxu0
        %v1583 = vadd.f32 %v1534, %v1582
        %v1584 = vpop.f32.mrf.mxu0
        %v1585 = vpop.f32.mrf.mxu0
        %v1586 = vpop.f32.mrf.mxu0
        %1587 = vdwg.mxu0
        %v1588 = vpack.c.bf16 %v1583, %v1583
        %s1589 = scalar_lea.vmem [#allocation2], 12
        %v1590 = vld [vmem:[%s1589] sm:$0xf]
        %v1592 = vsel %vm1065, %v1588, 0
        %v1595 = vsel %vm1065, %v1590, 0
        %1597 = vmatprep.subr.bf16.mxu0 0
        %1598 = vmatpush1.bf16.xpose.msra.mxu0 0
        %1599 = vmatprep.subr.bf16.mxu0 0
        %1600 = vmatpush1.bf16.xpose.msra.mxu0 0
        %1601 = vmatprep.subr.bf16.mxu0 0
        %1602 = vmatpush1.bf16.xpose.msra.mxu0 0
        %1603 = vmatprep.subr.bf16.mxu0 0
        %1604 = vmatpush1.bf16.xpose.msra.mxu0 0
        %1605 = vmatprep.subr.bf16.mxu0 0
        %1606 = vmatpush1.bf16.xpose.msra.mxu0 0
        %1607 = vmatprep.subr.bf16.mxu0 0
        %1608 = vmatpush1.bf16.xpose.msra.mxu0 0
        %1609 = vmatprep.subr.bf16.mxu0 0
        %1610 = vmatpush1.bf16.xpose.msra.mxu0 0
        %1611 = vmatprep.subr.bf16.mxu0 0
        %1612 = vmatpush1.bf16.xpose.msra.mxu0 %v1595
        %1613 = vmatprep.subr.bf16.mxu0 0
        %1614 = vmatpush2.bf16.xpose.msra.mxu0 0
        %1615 = vmatprep.subr.bf16.mxu0 0
        %1616 = vmatpush2.bf16.xpose.msra.mxu0 0
        %1617 = vmatprep.subr.bf16.mxu0 0
        %1618 = vmatpush2.bf16.xpose.msra.mxu0 0
        %1619 = vmatprep.subr.bf16.mxu0 0
        %1620 = vmatpush2.bf16.xpose.msra.mxu0 0
        %1621 = vmatprep.subr.bf16.mxu0 0
        %1622 = vmatpush2.bf16.xpose.msra.mxu0 0
        %1623 = vmatprep.subr.bf16.mxu0 0
        %1624 = vmatpush2.bf16.xpose.msra.mxu0 0
        %1625 = vmatprep.subr.bf16.mxu0 0
        %1626 = vmatpush2.bf16.xpose.msra.mxu0 0
        %1627 = vmatprep.subr.bf16.mxu0 0
        %1628 = vmatpush2.bf16.xpose.msra.mxu0 0
        %1629 = vmatprep.mubr.bf16.mxu0 0
        %1630 = vmatmul.mubr.bf16.gmra.mxu0 %v1592
        %v1631 = vpop.f32.mrf.mxu0
        %v1632 = vadd.f32 %v1063, %v1631
        %v1633 = vpop.f32.mrf.mxu0
        %v1634 = vpop.f32.mrf.mxu0
        %v1635 = vpop.f32.mrf.mxu0
        %1636 = vdwg.mxu0
        %v1637 = vsel %vm1065, %v1632, -inf
        %1638 = vmax.xlane.f32.xlu0 %v1637
        %v1639 = vpop.xlane.xlu0 %1638
        %v1640 = vsub.f32 %v1632, %v1639
        %v1641 = vmul.f32 %v1640, 1.442695
        %v1642 = vpow.pop %v1641
        %v1643 = vsel %vm1065, %v1642, 0.0
        %1644 = vadd.xlane.f32.xlu0 %v1643
        %v1645 = vpop.xlane.xlu0 %1644
        %v1646 = vrcp.pop %v1645
        %v1647 = vpack.c.bf16 %v1642, %v1642
        %s1648 = scalar_lea.vmem [#allocation3], 12
        %v1649 = vld [vmem:[%s1648] sm:$0xf]
        %v1651 = vsel %vm1065, %v1647, 0
        %v1654 = vsel %vm1127, %v1649, 0
        %1656 = vmatprep.subr.bf16.mxu0 0
        %1657 = vmatpush1.bf16.msra.mxu0 0
        %1658 = vmatprep.subr.bf16.mxu0 0
        %1659 = vmatpush1.bf16.msra.mxu0 0
        %1660 = vmatprep.subr.bf16.mxu0 0
        %1661 = vmatpush1.bf16.msra.mxu0 0
        %1662 = vmatprep.subr.bf16.mxu0 0
        %1663 = vmatpush1.bf16.msra.mxu0 0
        %1664 = vmatprep.subr.bf16.mxu0 0
        %1665 = vmatpush1.bf16.msra.mxu0 0
        %1666 = vmatprep.subr.bf16.mxu0 0
        %1667 = vmatpush1.bf16.msra.mxu0 0
        %1668 = vmatprep.subr.bf16.mxu0 0
        %1669 = vmatpush1.bf16.msra.mxu0 0
        %1670 = vmatprep.subr.bf16.mxu0 0
        %1671 = vmatpush1.bf16.msra.mxu0 %v1654
        %1672 = vmatprep.subr.bf16.mxu0 0
        %1673 = vmatpush2.bf16.msra.mxu0 0
        %1674 = vmatprep.subr.bf16.mxu0 0
        %1675 = vmatpush2.bf16.msra.mxu0 0
        %1676 = vmatprep.subr.bf16.mxu0 0
        %1677 = vmatpush2.bf16.msra.mxu0 0
        %1678 = vmatprep.subr.bf16.mxu0 0
        %1679 = vmatpush2.bf16.msra.mxu0 0
        %1680 = vmatprep.subr.bf16.mxu0 0
        %1681 = vmatpush2.bf16.msra.mxu0 0
        %1682 = vmatprep.subr.bf16.mxu0 0
        %1683 = vmatpush2.bf16.msra.mxu0 0
        %1684 = vmatprep.subr.bf16.mxu0 0
        %1685 = vmatpush2.bf16.msra.mxu0 0
        %1686 = vmatprep.subr.bf16.mxu0 0
        %1687 = vmatpush2.bf16.msra.mxu0 0
        %1688 = vmatprep.mubr.bf16.mxu0 0
        %1689 = vmatmul.mubr.bf16.gmra.mxu0 %v1651
        %v1690 = vpop.f32.mrf.mxu0
        %v1691 = vadd.f32 0.0, %v1690
        %v1692 = vpop.f32.mrf.mxu0
        %v1693 = vpop.f32.mrf.mxu0
        %v1694 = vpop.f32.mrf.mxu0
        %1695 = vdwg.mxu0
        %v1696 = vmul.f32 %v1691, %v1646
        %v1697 = vpack.c.bf16 %v1696, %v1696
        %1699 = vrot.lane.b32.xlu0 %v1347, 8
        %v1700 = vpop.permute.xlu0 %1699
        %1702 = vrot.lane.b32.xlu0 %v1522, 16
        %v1703 = vpop.permute.xlu0 %1702
        %1705 = vrot.lane.b32.xlu0 %v1697, 24
        %v1706 = vpop.permute.xlu0 %1705
        %v1709 = vsel %vm1065, %v1172, %v1700
        %vm1710 = vcmask 130048
        %v1712 = vsel %vm1710, %v1709, %v1703
        %vm1713 = vcmask 195584
        %v1715 = vsel %vm1713, %v1712, %v1706
        %v1716 = vld [vmem:[%s8] sm:$0xf]
        %v1717 = vld [vmem:[%s8 + $0x4] sm:$0xf]
        %v1718 = vld [vmem:[%s8 + $0x8] sm:$0xf]
        %v1719 = vld [vmem:[%s8 + $0xc] sm:$0xf]
        %v1720 = vld [vmem:[%s9] sm:$0x1]
        %v1722 = vlaneseq
        %v1723 = vshrl.u32 %v1722, 7
        %v1724 = vsub.s32 0, %v1723
        %v1725 = vrot.slane %v1720, %v1724
        %v1731 = vunpack.c.l.b16 %v1716
        %v1732 = vunpack.c.l.b16 %v1717
        %v1733 = vunpack.c.l.b16 %v1718
        %v1734 = vunpack.c.l.b16 %v1719
        %v1735 = vpack.c.b16 %v1732, %v1731
        %v1736 = vpack.c.b16 %v1734, %v1733
        %v1739 = vsel %vm1013, %v1715, 0
        %1741 = vmatprep.subr.bf16.mxu0 0
        %1742 = vmatpush1.bf16.msra.mxu0 0
        %1743 = vmatprep.subr.bf16.mxu0 0
        %1744 = vmatpush1.bf16.msra.mxu0 0
        %1745 = vmatprep.subr.bf16.mxu0 0
        %1746 = vmatpush1.bf16.msra.mxu0 0
        %1747 = vmatprep.subr.bf16.mxu0 0
        %1748 = vmatpush1.bf16.msra.mxu0 0
        %1749 = vmatprep.subr.bf16.mxu0 0
        %1750 = vmatpush1.bf16.msra.mxu0 0
        %1751 = vmatprep.subr.bf16.mxu0 0
        %1752 = vmatpush1.bf16.msra.mxu0 0
        %1753 = vmatprep.subr.bf16.mxu0 0
        %1754 = vmatpush1.bf16.msra.mxu0 %v1736
        %1755 = vmatprep.subr.bf16.mxu0 0
        %1756 = vmatpush1.bf16.msra.mxu0 %v1735
        %1757 = vmatprep.subr.bf16.mxu0 0
        %1758 = vmatpush2.bf16.msra.mxu0 0
        %1759 = vmatprep.subr.bf16.mxu0 0
        %1760 = vmatpush2.bf16.msra.mxu0 0
        %1761 = vmatprep.subr.bf16.mxu0 0
        %1762 = vmatpush2.bf16.msra.mxu0 0
        %1763 = vmatprep.subr.bf16.mxu0 0
        %1764 = vmatpush2.bf16.msra.mxu0 0
        %1765 = vmatprep.subr.bf16.mxu0 0
        %1766 = vmatpush2.bf16.msra.mxu0 0
        %1767 = vmatprep.subr.bf16.mxu0 0
        %1768 = vmatpush2.bf16.msra.mxu0 0
        %1769 = vmatprep.subr.bf16.mxu0 0
        %1770 = vmatpush2.bf16.msra.mxu0 0
        %1771 = vmatprep.subr.bf16.mxu0 0
        %1772 = vmatpush2.bf16.msra.mxu0 0
        %1773 = vmatprep.mubr.bf16.mxu0 0
        %1774 = vmatmul.mubr.bf16.gmra.mxu0 %v1739
        %v1775 = vpop.f32.mrf.mxu0
        %v1776 = vadd.f32 %v1725, %v1775
        %v1777 = vpop.f32.mrf.mxu0
        %v1778 = vpop.f32.mrf.mxu0
        %v1779 = vpop.f32.mrf.mxu0
        %1780 = vdwg.mxu0
        %v1781 = vadd.f32 %v987, %v1776
        %v1782 = vsel %vm1013, %v1781, 0.0
        %1783 = vadd.xlane.f32.xlu0 %v1782
        %v1784 = vpop.xlane.xlu0 %1783
        %v1785 = vrcp.pop 32.0
        %v1786 = vmul.f32 %v1784, %v1785
        %v1787 = vsub.f32 %v1781, %v1786
        %v1788 = vmul.f32 %v1787, %v1787
        %v1789 = vsel %vm1013, %v1788, 0.0
        %1790 = vadd.xlane.f32.xlu0 %v1789
        %v1791 = vpop.xlane.xlu0 %1790
        %v1792 = vmul.f32 %v1791, %v1785
        %v1793 = vadd.f32 %v1792, 1e-12
        %v1794 = vrsqrt.pop %v1793
        %v1795 = vmul.f32 %v1787, %v1794
        %v1796 = vld [vmem:[%s10] sm:$0x1]
        %v1798 = vlaneseq
        %v1799 = vshrl.u32 %v1798, 7
        %v1800 = vsub.s32 0, %v1799
        %v1801 = vrot.slane %v1796, %v1800
        %v1803 = vmul.f32 %v1795, %v1801
        %v1804 = vld [vmem:[%s11] sm:$0x1]
        %v1806 = vlaneseq
        %v1807 = vshrl.u32 %v1806, 7
        %v1808 = vsub.s32 0, %v1807
        %v1809 = vrot.slane %v1804, %v1808
        %v1811 = vadd.f32 %v1803, %v1809
        %1812 = vst.msk [vmem:[%s429] sm:$0xff] %vm1013, %v1811
        %s1813 = sand.u32 %s310, 1
        %s1814 = scalar_lea.sflag [#allocation5], %s1813
        %s1815 = sand.u32 %s310, 1
        %s1816 = smul.addr %s1815, 8
        %s1817 = scalar_lea.vmem [#allocation4], %s1816
        // Predicated region
        $region73: #{tpu_custom_call.1} parent=67 // pred_check
          %p1818 = pneg %p320
        $region74: #{tpu_custom_call.1} parent=67 // pred_check_branch
          %1820 = sbr.rel (%p1818) target = $region76
        $region75: #{tpu_custom_call.1} parent=67 // pred_region
          %s1822 = ssub.s32 128, 128
          %1823 = vsyncadd %s1814, %s1822
          %s1824 = sadd.s32 %s31, %s30
          %s1825 = smul.addr %s1824, 128
          %s1826 = scalar_lea.hbm %s12, %s1825
          %s1828 = sshll.u32 %s1817, 4
          %s1829 = int_to_ptr.vmem [resolvable:$true] %s1828
          %1831 = dma.vmem_to_hbm [thread:$0]  %s1829, 128, %s1826, %s1814
        $region76: #{tpu_custom_call.1} parent=67 // pred_fallthru
          _
      $region68: #{tpu_custom_call.1} parent=5 // pred_fallthru
        _
      %p1832 = scmp.le.s32.totalorder 2, %s21
      // Predicated region
      $region77: #{tpu_custom_call.1} parent=5 // pred_check
        %p1833 = pneg %p1832
      $region78: #{tpu_custom_call.1} parent=5 // pred_check_branch
        %1835 = sbr.rel (%p1833) target = $region80
      $region79: #{tpu_custom_call.1} parent=5 // pred_region
        %s1836 = ssub.s32 %s21, 2
        // Predicated region
        $region81: #{tpu_custom_call.1} parent=79 // pred_check
          %p1837 = pneg %p326
        $region82: #{tpu_custom_call.1} parent=79 // pred_check_branch
          %1839 = sbr.rel (%p1837) target = $region84
        $region83: #{tpu_custom_call.1} parent=79 // pred_region
          %s1840 = sand.u32 %s311, 1
          %s1841 = scalar_lea.sflag [#allocation5], %s1840
          %s1842 = sand.u32 %s311, 1
          %s1843 = smul.addr %s1842, 8
          %s1844 = scalar_lea.vmem [#allocation4], %s1843
          %1845 = dma.done %s1841, 128
        $region84: #{tpu_custom_call.1} parent=79 // pred_fallthru
          _
      $region80: #{tpu_custom_call.1} parent=5 // pred_fallthru
        _
    $region6: #{tpu_custom_call.1} parent=1 // loop_footer
      %s25 = sadd.s32 1, %s21
    $region7: #{tpu_custom_call.1} parent=1 // loop_footer_branch
      %20 = sbr.rel target = $region3
    $region8: #{tpu_custom_call.1} parent=1 // loop_exit
      _
    %1846 = vsyncpa [#allocation5], 1
    %s1847 = scalar_lea.sflag [#allocation5], 1
    %1848 = vsyncpa %s1847, 1

</llo_original>
